<compile_context>
chip_gen: v7x
topology: tpu7x:2x2x1
jax: 0.10.0
libtpu: 0.0.40
codegen_flags: <defaults>
</compile_context>

<pallas_src>
import functools

import jax
import jax.numpy as jnp
from jax import lax
from jax.experimental import pallas as pl
from jax.experimental.pallas import tpu as pltpu


# ----------------------------------------------------------------------------
# Fused kernel: one grid step = Bt samples, everything stays in vregs/VMEM.
# ----------------------------------------------------------------------------
def _fused_block_kernel(x_ref, g_ref, b_ref, m_ref,
                        w1_ref, b1_ref, w2_ref, b2_ref,
                        o_ref, *, H, W, Bt, eps):
    N = H * W
    L = Bt * N

    g = g_ref[...]          # (Cin, N) f32
    beta = b_ref[...]       # (Cin, N) f32

    # ---- per-sample LayerNorm over (C, H, W), one-pass statistics ----------
    ln_parts = []
    for b in range(Bt):
        xb = x_ref[b].astype(jnp.float32)                       # (Cin, N)
        inv_n = 1.0 / (xb.shape[0] * N)
        s1 = jnp.sum(jnp.sum(xb, axis=1, keepdims=True),
                     axis=0, keepdims=True)                      # (1, 1)
        s2 = jnp.sum(jnp.sum(xb * xb, axis=1, keepdims=True),
                     axis=0, keepdims=True)                      # (1, 1)
        mean = s1 * inv_n
        var = s2 * inv_n - mean * mean
        ln_parts.append((xb - mean) * lax.rsqrt(var + eps) * g + beta)

    # Fold the batch tile into the lane dimension (lane-aligned concat).
    v = ln_parts[0] if Bt == 1 else jnp.concatenate(ln_parts, axis=-1)  # (Cin,L)

    masks = m_ref[...]                                           # (9, N)
    if Bt > 1:
        masks = jnp.concatenate([masks] * Bt, axis=-1)           # (9, L)

    def conv3x3_silu(vin, w_ref, bias):
        # vin: (Ci, L).  9 accumulated tap matmuls; shifted views via
        # pltpu.roll (XLU), invalid taps killed by precomputed column masks.
        acc = None
        for ky in range(3):
            for kx in range(3):
                tap = ky * 3 + kx
                s = (ky - 1) * W + (kx - 1)
                shifted = vin if s == 0 else pltpu.roll(
                    vin, shift=(-s) % L, axis=1)
                if (ky, kx) != (1, 1):
                    shifted = shifted * masks[tap:tap + 1, :]
                c = jnp.dot(w_ref[tap], shifted,
                            preferred_element_type=jnp.float32)  # (Cout, L)
                acc = c if acc is None else acc + c
        acc = acc + bias                                         # (Cout,1) bcast
        return acc * jax.nn.sigmoid(acc)                         # SiLU (EUP)

    h1 = conv3x3_silu(v, w1_ref, b1_ref[...])                    # (Cout, L)
    h2 = conv3x3_silu(h1, w2_ref, b2_ref[...])                   # (Cout, L)

    # Lane-dense NCHW stores, one 256-lane slice per sample.
    for b in range(Bt):
        o_ref[b] = h2[:, b * N:(b + 1) * N].astype(o_ref.dtype)


# ----------------------------------------------------------------------------
# One-time parameter / mask preparation (hoisted off the forward path).
# ----------------------------------------------------------------------------
def prepare_params(params, H, W):
    N = H * W
    K = 3
    w1 = params["conv1_w"]
    w2 = params["conv2_w"]
    cout, cin = w1.shape[0], w1.shape[1]

    # (O, I, kH, kW) -> (kH*kW, O, I): tap-major weights for per-tap matmuls.
    w1t = jnp.transpose(w1, (2, 3, 0, 1)).reshape(K * K, cout, cin)
    w2t = jnp.transpose(w2, (2, 3, 0, 1)).reshape(K * K, cout, cout)

    # Per-tap validity masks: tap (ky,kx) reads (y+ky-1, x+kx-1).
    yy = jnp.arange(N, dtype=jnp.int32) // W
    xx = jnp.arange(N, dtype=jnp.int32) % W
    masks = []
    for ky in range(K):
        for kx in range(K):
            valid = ((yy + ky - 1 >= 0) & (yy + ky - 1 < H) &
                     (xx + kx - 1 >= 0) & (xx + kx - 1 < W))
            masks.append(valid.astype(jnp.float32))
    masks = jnp.stack(masks, axis=0)                              # (9, N)

    return {
        "gamma": params["ln_w"].reshape(cin, N).astype(jnp.float32),
        "beta": params["ln_b"].reshape(cin, N).astype(jnp.float32),
        "masks": masks,
        "w1": w1t.astype(jnp.float32),
        "b1": params["conv1_b"].reshape(cout, 1).astype(jnp.float32),
        "w2": w2t.astype(jnp.float32),
        "b2": params["conv2_b"].reshape(cout, 1).astype(jnp.float32),
    }


# ----------------------------------------------------------------------------
# Forward: single fused pallas_call, batch-tiled grid, NCHW in / NCHW out.
# ----------------------------------------------------------------------------
def my_block_forward(x_nchw, prep, eps=1e-5):
    B, Cin, H, W = x_nchw.shape
    N = H * W
    Cout = prep["w1"].shape[1]

    # Batch tiling: keep >=2 grid tiles when B >= 2 (both v7x TensorCores;
    # the extra ~0.35 us step is noise on single-TC v5e/v6e), fold the rest
    # of the batch into the lane dimension.  Cap the fold at 8 samples to
    # bound unrolling and per-step live VMEM (well under v7x's 64 MiB).
    n_tiles = 2 if B >= 2 else 1
    bt = min(pl.cdiv(B, n_tiles), 8)
    n_tiles = pl.cdiv(B, bt)
    Bp = n_tiles * bt

    x_flat = x_nchw.reshape(B, Cin, N)             # metadata-only reshape
    if Bp != B:
        x_flat = jnp.pad(x_flat, ((0, Bp - B), (0, 0), (0, 0)))

    out = pl.pallas_call(
        functools.partial(_fused_block_kernel, H=H, W=W, Bt=bt, eps=eps),
        out_shape=jax.ShapeDtypeStruct((Bp, Cout, N), x_nchw.dtype),
        grid_spec=pltpu.PrefetchScalarGridSpec(
            num_scalar_prefetch=0,
            grid=(n_tiles,),
            in_specs=[
                pl.BlockSpec((bt, Cin, N), lambda t: (t, 0, 0)),    # x tile
                pl.BlockSpec((Cin, N), lambda t: (0, 0)),           # LN gamma
                pl.BlockSpec((Cin, N), lambda t: (0, 0)),           # LN beta
                pl.BlockSpec((9, N), lambda t: (0, 0)),             # tap masks
                pl.BlockSpec((9, Cout, Cin), lambda t: (0, 0, 0)),  # w1 taps
                pl.BlockSpec((Cout, 1), lambda t: (0, 0)),          # b1
                pl.BlockSpec((9, Cout, Cout), lambda t: (0, 0, 0)),  # w2 taps
                pl.BlockSpec((Cout, 1), lambda t: (0, 0)),          # b2
            ],
            out_specs=pl.BlockSpec((bt, Cout, N), lambda t: (t, 0, 0)),
        ),
        compiler_params=pltpu.CompilerParams(
            dimension_semantics=("parallel",)),      # batch tiles across TCs
    )(x_flat, prep["gamma"], prep["beta"], prep["masks"],
      prep["w1"], prep["b1"], prep["w2"], prep["b2"])

    return out[:B].reshape(B, Cout, H, W)           # metadata-only reshape


# ----------------------------------------------------------------------------
# Pure-JAX reference for validation.
# ----------------------------------------------------------------------------
def reference_forward(x, params, eps=1e-5):
    B, C, H, W = x.shape
    xf = x.reshape(B, -1)
    mean = jnp.mean(xf, axis=-1, keepdims=True)
    var = jnp.mean((xf - mean) ** 2, axis=-1, keepdims=True)
    xn = ((xf - mean) * lax.rsqrt(var + eps)).reshape(B, C, H, W)
    out = xn * params["ln_w"][None] + params["ln_b"][None]

    def conv(v, w, b):
        y = lax.conv_general_dilated(
            v, w, window_strides=(1, 1), padding=((1, 1), (1, 1)),
            dimension_numbers=("NCHW", "OIHW", "NCHW"))
        return y + b.reshape(1, -1, 1, 1)

    out = conv(out, params["conv1_w"], params["conv1_b"])
    out = out * jax.nn.sigmoid(out)
    out = conv(out, params["conv2_w"], params["conv2_b"])
    out = out * jax.nn.sigmoid(out)
    return out


if __name__ == "__main__":
    # shape=(C,H,W)=(4,16,16), in_c=4, out_c=8, batch=2, kernel=3.
    B, Cin, Cout, H, W, K = 2, 4, 8, 16, 16, 3

    key = jax.random.PRNGKey(0)
    kx, kg, kb, k1w, k1b, k2w, k2b = jax.random.split(key, 7)

    x = jax.random.normal(kx, (B, Cin, H, W), dtype=jnp.float32)

    fan1, fan2 = Cin * K * K, Cout * K * K
    params = {
        "ln_w": 1.0 + 0.1 * jax.random.normal(kg, (Cin, H, W), jnp.float32),
        "ln_b": 0.1 * jax.random.normal(kb, (Cin, H, W), jnp.float32),
        "conv1_w": jax.random.uniform(k1w, (Cout, Cin, K, K), jnp.float32,
                                      -1.0, 1.0) / jnp.sqrt(fan1),
        "conv1_b": jax.random.uniform(k1b, (Cout,), jnp.float32,
                                      -1.0, 1.0) / jnp.sqrt(fan1),
        "conv2_w": jax.random.uniform(k2w, (Cout, Cout, K, K), jnp.float32,
                                      -1.0, 1.0) / jnp.sqrt(fan2),
        "conv2_b": jax.random.uniform(k2b, (Cout,), jnp.float32,
                                      -1.0, 1.0) / jnp.sqrt(fan2),
    }

    prep = prepare_params(params, H, W)              # one-time layout prep

    out = jax.jit(my_block_forward)(x, prep)
    out = jax.block_until_ready(out)

    ref = reference_forward(x, params)
    assert out.shape == (B, Cout, H, W), out.shape
    max_err = float(jnp.max(jnp.abs(out - ref)))
    assert jnp.allclose(out, ref, atol=2e-3, rtol=2e-3), max_err

    print("KERNEL_OK")
</pallas_src>

<mosaic_0001>
module attributes {stable_mosaic.version = 11 : i64} {
  func.func @_fused_block_kernel(%arg0: i32, %arg1: memref<1x4x256xf32, #tpu.memory_space<vmem>>, %arg2: memref<4x256xf32, #tpu.memory_space<vmem>>, %arg3: memref<4x256xf32, #tpu.memory_space<vmem>>, %arg4: memref<9x256xf32, #tpu.memory_space<vmem>>, %arg5: memref<9x8x4xf32, #tpu.memory_space<vmem>>, %arg6: memref<8x1xf32, #tpu.memory_space<vmem>>, %arg7: memref<9x8x8xf32, #tpu.memory_space<vmem>>, %arg8: memref<8x1xf32, #tpu.memory_space<vmem>>, %arg9: memref<1x8x256xf32, #tpu.memory_space<vmem>>) attributes {dimension_semantics = [#tpu.dimension_semantics<parallel>], iteration_bounds = array<i64: 2>, scalar_prefetch = 0 : i64, scratch_operands = 0 : i64, tpu.core_type = #tpu.core_type<tc>, window_params = [{transform_indices = @transform_0, window_bounds = array<i64: 1, 4, 256>}, {pipeline_mode = #tpu.pipeline_mode<synchronous>, transform_indices = @transform_1, window_bounds = array<i64: 4, 256>}, {pipeline_mode = #tpu.pipeline_mode<synchronous>, transform_indices = @transform_2, window_bounds = array<i64: 4, 256>}, {pipeline_mode = #tpu.pipeline_mode<synchronous>, transform_indices = @transform_3, window_bounds = array<i64: 9, 256>}, {pipeline_mode = #tpu.pipeline_mode<synchronous>, transform_indices = @transform_4, window_bounds = array<i64: 9, 8, 4>}, {pipeline_mode = #tpu.pipeline_mode<synchronous>, transform_indices = @transform_5, window_bounds = array<i64: 8, 1>}, {pipeline_mode = #tpu.pipeline_mode<synchronous>, transform_indices = @transform_6, window_bounds = array<i64: 9, 8, 8>}, {pipeline_mode = #tpu.pipeline_mode<synchronous>, transform_indices = @transform_7, window_bounds = array<i64: 8, 1>}, {transform_indices = @transform_8, window_bounds = array<i64: 1, 8, 256>}]} {
    %c0 = arith.constant 0 : index
    %c0_0 = arith.constant 0 : index
    %0 = vector.load %arg2[%c0, %c0_0] : memref<4x256xf32, #tpu.memory_space<vmem>>, vector<4x256xf32>
    %c0_1 = arith.constant 0 : index
    %c0_2 = arith.constant 0 : index
    %1 = vector.load %arg3[%c0_1, %c0_2] : memref<4x256xf32, #tpu.memory_space<vmem>>, vector<4x256xf32>
    %c0_3 = arith.constant 0 : index
    %c0_4 = arith.constant 0 : index
    %c0_5 = arith.constant 0 : index
    %2 = vector.load %arg1[%c0_3, %c0_4, %c0_5] : memref<1x4x256xf32, #tpu.memory_space<vmem>>, vector<1x4x256xf32>
    %3 = vector.shape_cast %2 : vector<1x4x256xf32> to vector<4x256xf32>
    %cst = arith.constant dense<0.000000e+00> : vector<4xf32>
    %4 = vector.multi_reduction <add>, %3, %cst [1] : vector<4x256xf32> to vector<4xf32>
    %5 = vector.shape_cast %4 : vector<4xf32> to vector<4x1xf32>
    %cst_6 = arith.constant dense<0.000000e+00> : vector<1xf32>
    %6 = vector.multi_reduction <add>, %5, %cst_6 [0] : vector<4x1xf32> to vector<1xf32>
    %7 = vector.shape_cast %6 : vector<1xf32> to vector<1x1xf32>
    %8 = arith.mulf %3, %3 : vector<4x256xf32>
    %cst_7 = arith.constant dense<0.000000e+00> : vector<4xf32>
    %9 = vector.multi_reduction <add>, %8, %cst_7 [1] : vector<4x256xf32> to vector<4xf32>
    %10 = vector.shape_cast %9 : vector<4xf32> to vector<4x1xf32>
    %cst_8 = arith.constant dense<0.000000e+00> : vector<1xf32>
    %11 = vector.multi_reduction <add>, %10, %cst_8 [0] : vector<4x1xf32> to vector<1xf32>
    %12 = vector.shape_cast %11 : vector<1xf32> to vector<1x1xf32>
    %cst_9 = arith.constant 9.765625E-4 : f32
    %13 = vector.broadcast %cst_9 : f32 to vector<1x1xf32>
    %14 = arith.mulf %7, %13 : vector<1x1xf32>
    %cst_10 = arith.constant 9.765625E-4 : f32
    %15 = vector.broadcast %cst_10 : f32 to vector<1x1xf32>
    %16 = arith.mulf %12, %15 : vector<1x1xf32>
    %17 = arith.mulf %14, %14 : vector<1x1xf32>
    %18 = arith.subf %16, %17 : vector<1x1xf32>
    %19 = vector.broadcast %14 : vector<1x1xf32> to vector<4x256xf32>
    %20 = arith.subf %3, %19 : vector<4x256xf32>
    %cst_11 = arith.constant 9.99999974E-6 : f32
    %21 = vector.broadcast %cst_11 : f32 to vector<1x1xf32>
    %22 = arith.addf %18, %21 : vector<1x1xf32>
    %23 = math.rsqrt %22 : vector<1x1xf32>
    %24 = vector.broadcast %23 : vector<1x1xf32> to vector<4x256xf32>
    %25 = arith.mulf %20, %24 : vector<4x256xf32>
    %26 = arith.mulf %25, %0 : vector<4x256xf32>
    %27 = arith.addf %26, %1 : vector<4x256xf32>
    %c0_12 = arith.constant 0 : index
    %c0_13 = arith.constant 0 : index
    %28 = vector.load %arg4[%c0_12, %c0_13] : memref<9x256xf32, #tpu.memory_space<vmem>>, vector<9x256xf32>
    %c0_14 = arith.constant 0 : index
    %c0_15 = arith.constant 0 : index
    %29 = vector.load %arg6[%c0_14, %c0_15] : memref<8x1xf32, #tpu.memory_space<vmem>>, vector<8x1xf32>
    %c17_i32 = arith.constant 17 : i32
    %30 = tpu.dynamic_rotate %27 by %c17_i32 dim 1 : vector<4x256xf32>, i32 -> vector<4x256xf32>
    %31 = vector.extract_strided_slice %28 {offsets = [0, 0], sizes = [1, 256], strides = [1, 1]} : vector<9x256xf32> to vector<1x256xf32>
    %32 = vector.broadcast %31 : vector<1x256xf32> to vector<4x256xf32>
    %33 = arith.mulf %30, %32 : vector<4x256xf32>
    %c0_16 = arith.constant 0 : index
    %c0_17 = arith.constant 0 : index
    %c0_18 = arith.constant 0 : index
    %34 = vector.load %arg5[%c0_16, %c0_17, %c0_18] : memref<9x8x4xf32, #tpu.memory_space<vmem>>, vector<1x8x4xf32>
    %35 = vector.shape_cast %34 : vector<1x8x4xf32> to vector<8x4xf32>
    %cst_19 = arith.constant dense<0.000000e+00> : vector<8x256xf32>
    %36 = tpu.matmul %35, %33, %cst_19 {dimension_numbers = #tpu.dot_dimension_numbers<[1], [0], [0], [1], [0, 0, 1, 1], [], []>} : vector<8x4xf32>, vector<4x256xf32>, vector<8x256xf32> -> vector<8x256xf32>
    %c16_i32 = arith.constant 16 : i32
    %37 = tpu.dynamic_rotate %27 by %c16_i32 dim 1 : vector<4x256xf32>, i32 -> vector<4x256xf32>
    %38 = vector.extract_strided_slice %28 {offsets = [1, 0], sizes = [1, 256], strides = [1, 1]} : vector<9x256xf32> to vector<1x256xf32>
    %39 = vector.broadcast %38 : vector<1x256xf32> to vector<4x256xf32>
    %40 = arith.mulf %37, %39 : vector<4x256xf32>
    %c1 = arith.constant 1 : index
    %c0_20 = arith.constant 0 : index
    %c0_21 = arith.constant 0 : index
    %41 = vector.load %arg5[%c1, %c0_20, %c0_21] : memref<9x8x4xf32, #tpu.memory_space<vmem>>, vector<1x8x4xf32>
    %42 = vector.shape_cast %41 : vector<1x8x4xf32> to vector<8x4xf32>
    %cst_22 = arith.constant dense<0.000000e+00> : vector<8x256xf32>
    %43 = tpu.matmul %42, %40, %cst_22 {dimension_numbers = #tpu.dot_dimension_numbers<[1], [0], [0], [1], [0, 0, 1, 1], [], []>} : vector<8x4xf32>, vector<4x256xf32>, vector<8x256xf32> -> vector<8x256xf32>
    %44 = arith.addf %36, %43 : vector<8x256xf32>
    %c15_i32 = arith.constant 15 : i32
    %45 = tpu.dynamic_rotate %27 by %c15_i32 dim 1 : vector<4x256xf32>, i32 -> vector<4x256xf32>
    %46 = vector.extract_strided_slice %28 {offsets = [2, 0], sizes = [1, 256], strides = [1, 1]} : vector<9x256xf32> to vector<1x256xf32>
    %47 = vector.broadcast %46 : vector<1x256xf32> to vector<4x256xf32>
    %48 = arith.mulf %45, %47 : vector<4x256xf32>
    %c2 = arith.constant 2 : index
    %c0_23 = arith.constant 0 : index
    %c0_24 = arith.constant 0 : index
    %49 = vector.load %arg5[%c2, %c0_23, %c0_24] : memref<9x8x4xf32, #tpu.memory_space<vmem>>, vector<1x8x4xf32>
    %50 = vector.shape_cast %49 : vector<1x8x4xf32> to vector<8x4xf32>
    %cst_25 = arith.constant dense<0.000000e+00> : vector<8x256xf32>
    %51 = tpu.matmul %50, %48, %cst_25 {dimension_numbers = #tpu.dot_dimension_numbers<[1], [0], [0], [1], [0, 0, 1, 1], [], []>} : vector<8x4xf32>, vector<4x256xf32>, vector<8x256xf32> -> vector<8x256xf32>
    %52 = arith.addf %44, %51 : vector<8x256xf32>
    %c1_i32 = arith.constant 1 : i32
    %53 = tpu.dynamic_rotate %27 by %c1_i32 dim 1 : vector<4x256xf32>, i32 -> vector<4x256xf32>
    %54 = vector.extract_strided_slice %28 {offsets = [3, 0], sizes = [1, 256], strides = [1, 1]} : vector<9x256xf32> to vector<1x256xf32>
    %55 = vector.broadcast %54 : vector<1x256xf32> to vector<4x256xf32>
    %56 = arith.mulf %53, %55 : vector<4x256xf32>
    %c3 = arith.constant 3 : index
    %c0_26 = arith.constant 0 : index
    %c0_27 = arith.constant 0 : index
    %57 = vector.load %arg5[%c3, %c0_26, %c0_27] : memref<9x8x4xf32, #tpu.memory_space<vmem>>, vector<1x8x4xf32>
    %58 = vector.shape_cast %57 : vector<1x8x4xf32> to vector<8x4xf32>
    %cst_28 = arith.constant dense<0.000000e+00> : vector<8x256xf32>
    %59 = tpu.matmul %58, %56, %cst_28 {dimension_numbers = #tpu.dot_dimension_numbers<[1], [0], [0], [1], [0, 0, 1, 1], [], []>} : vector<8x4xf32>, vector<4x256xf32>, vector<8x256xf32> -> vector<8x256xf32>
    %60 = arith.addf %52, %59 : vector<8x256xf32>
    %c4 = arith.constant 4 : index
    %c0_29 = arith.constant 0 : index
    %c0_30 = arith.constant 0 : index
    %61 = vector.load %arg5[%c4, %c0_29, %c0_30] : memref<9x8x4xf32, #tpu.memory_space<vmem>>, vector<1x8x4xf32>
    %62 = vector.shape_cast %61 : vector<1x8x4xf32> to vector<8x4xf32>
    %cst_31 = arith.constant dense<0.000000e+00> : vector<8x256xf32>
    %63 = tpu.matmul %62, %27, %cst_31 {dimension_numbers = #tpu.dot_dimension_numbers<[1], [0], [0], [1], [0, 0, 1, 1], [], []>} : vector<8x4xf32>, vector<4x256xf32>, vector<8x256xf32> -> vector<8x256xf32>
    %64 = arith.addf %60, %63 : vector<8x256xf32>
    %c255_i32 = arith.constant 255 : i32
    %65 = tpu.dynamic_rotate %27 by %c255_i32 dim 1 : vector<4x256xf32>, i32 -> vector<4x256xf32>
    %66 = vector.extract_strided_slice %28 {offsets = [5, 0], sizes = [1, 256], strides = [1, 1]} : vector<9x256xf32> to vector<1x256xf32>
    %67 = vector.broadcast %66 : vector<1x256xf32> to vector<4x256xf32>
    %68 = arith.mulf %65, %67 : vector<4x256xf32>
    %c5 = arith.constant 5 : index
    %c0_32 = arith.constant 0 : index
    %c0_33 = arith.constant 0 : index
    %69 = vector.load %arg5[%c5, %c0_32, %c0_33] : memref<9x8x4xf32, #tpu.memory_space<vmem>>, vector<1x8x4xf32>
    %70 = vector.shape_cast %69 : vector<1x8x4xf32> to vector<8x4xf32>
    %cst_34 = arith.constant dense<0.000000e+00> : vector<8x256xf32>
    %71 = tpu.matmul %70, %68, %cst_34 {dimension_numbers = #tpu.dot_dimension_numbers<[1], [0], [0], [1], [0, 0, 1, 1], [], []>} : vector<8x4xf32>, vector<4x256xf32>, vector<8x256xf32> -> vector<8x256xf32>
    %72 = arith.addf %64, %71 : vector<8x256xf32>
    %c241_i32 = arith.constant 241 : i32
    %73 = tpu.dynamic_rotate %27 by %c241_i32 dim 1 : vector<4x256xf32>, i32 -> vector<4x256xf32>
    %74 = vector.extract_strided_slice %28 {offsets = [6, 0], sizes = [1, 256], strides = [1, 1]} : vector<9x256xf32> to vector<1x256xf32>
    %75 = vector.broadcast %74 : vector<1x256xf32> to vector<4x256xf32>
    %76 = arith.mulf %73, %75 : vector<4x256xf32>
    %c6 = arith.constant 6 : index
    %c0_35 = arith.constant 0 : index
    %c0_36 = arith.constant 0 : index
    %77 = vector.load %arg5[%c6, %c0_35, %c0_36] : memref<9x8x4xf32, #tpu.memory_space<vmem>>, vector<1x8x4xf32>
    %78 = vector.shape_cast %77 : vector<1x8x4xf32> to vector<8x4xf32>
    %cst_37 = arith.constant dense<0.000000e+00> : vector<8x256xf32>
    %79 = tpu.matmul %78, %76, %cst_37 {dimension_numbers = #tpu.dot_dimension_numbers<[1], [0], [0], [1], [0, 0, 1, 1], [], []>} : vector<8x4xf32>, vector<4x256xf32>, vector<8x256xf32> -> vector<8x256xf32>
    %80 = arith.addf %72, %79 : vector<8x256xf32>
    %c240_i32 = arith.constant 240 : i32
    %81 = tpu.dynamic_rotate %27 by %c240_i32 dim 1 : vector<4x256xf32>, i32 -> vector<4x256xf32>
    %82 = vector.extract_strided_slice %28 {offsets = [7, 0], sizes = [1, 256], strides = [1, 1]} : vector<9x256xf32> to vector<1x256xf32>
    %83 = vector.broadcast %82 : vector<1x256xf32> to vector<4x256xf32>
    %84 = arith.mulf %81, %83 : vector<4x256xf32>
    %c7 = arith.constant 7 : index
    %c0_38 = arith.constant 0 : index
    %c0_39 = arith.constant 0 : index
    %85 = vector.load %arg5[%c7, %c0_38, %c0_39] : memref<9x8x4xf32, #tpu.memory_space<vmem>>, vector<1x8x4xf32>
    %86 = vector.shape_cast %85 : vector<1x8x4xf32> to vector<8x4xf32>
    %cst_40 = arith.constant dense<0.000000e+00> : vector<8x256xf32>
    %87 = tpu.matmul %86, %84, %cst_40 {dimension_numbers = #tpu.dot_dimension_numbers<[1], [0], [0], [1], [0, 0, 1, 1], [], []>} : vector<8x4xf32>, vector<4x256xf32>, vector<8x256xf32> -> vector<8x256xf32>
    %88 = arith.addf %80, %87 : vector<8x256xf32>
    %c239_i32 = arith.constant 239 : i32
    %89 = tpu.dynamic_rotate %27 by %c239_i32 dim 1 : vector<4x256xf32>, i32 -> vector<4x256xf32>
    %90 = vector.extract_strided_slice %28 {offsets = [8, 0], sizes = [1, 256], strides = [1, 1]} : vector<9x256xf32> to vector<1x256xf32>
    %91 = vector.broadcast %90 : vector<1x256xf32> to vector<4x256xf32>
    %92 = arith.mulf %89, %91 : vector<4x256xf32>
    %c8 = arith.constant 8 : index
    %c0_41 = arith.constant 0 : index
    %c0_42 = arith.constant 0 : index
    %93 = vector.load %arg5[%c8, %c0_41, %c0_42] : memref<9x8x4xf32, #tpu.memory_space<vmem>>, vector<1x8x4xf32>
    %94 = vector.shape_cast %93 : vector<1x8x4xf32> to vector<8x4xf32>
    %cst_43 = arith.constant dense<0.000000e+00> : vector<8x256xf32>
    %95 = tpu.matmul %94, %92, %cst_43 {dimension_numbers = #tpu.dot_dimension_numbers<[1], [0], [0], [1], [0, 0, 1, 1], [], []>} : vector<8x4xf32>, vector<4x256xf32>, vector<8x256xf32> -> vector<8x256xf32>
    %96 = arith.addf %88, %95 : vector<8x256xf32>
    %97 = vector.broadcast %29 : vector<8x1xf32> to vector<8x256xf32>
    %98 = arith.addf %96, %97 : vector<8x256xf32>
    %99 = arith.negf %98 : vector<8x256xf32>
    %100 = math.exp %99 : vector<8x256xf32>
    %cst_44 = arith.constant 1.000000e+00 : f32
    %101 = vector.broadcast %cst_44 : f32 to vector<8x256xf32>
    %102 = arith.addf %101, %100 : vector<8x256xf32>
    %103 = arith.divf %101, %102 : vector<8x256xf32>
    %104 = arith.mulf %98, %103 : vector<8x256xf32>
    %c0_45 = arith.constant 0 : index
    %c0_46 = arith.constant 0 : index
    %105 = vector.load %arg8[%c0_45, %c0_46] : memref<8x1xf32, #tpu.memory_space<vmem>>, vector<8x1xf32>
    %c17_i32_47 = arith.constant 17 : i32
    %106 = tpu.dynamic_rotate %104 by %c17_i32_47 dim 1 : vector<8x256xf32>, i32 -> vector<8x256xf32>
    %107 = vector.extract_strided_slice %28 {offsets = [0, 0], sizes = [1, 256], strides = [1, 1]} : vector<9x256xf32> to vector<1x256xf32>
    %108 = vector.broadcast %107 : vector<1x256xf32> to vector<8x256xf32>
    %109 = arith.mulf %106, %108 : vector<8x256xf32>
    %c0_48 = arith.constant 0 : index
    %c0_49 = arith.constant 0 : index
    %c0_50 = arith.constant 0 : index
    %110 = vector.load %arg7[%c0_48, %c0_49, %c0_50] : memref<9x8x8xf32, #tpu.memory_space<vmem>>, vector<1x8x8xf32>
    %111 = vector.shape_cast %110 : vector<1x8x8xf32> to vector<8x8xf32>
    %cst_51 = arith.constant dense<0.000000e+00> : vector<8x256xf32>
    %112 = tpu.matmul %111, %109, %cst_51 {dimension_numbers = #tpu.dot_dimension_numbers<[1], [0], [0], [1], [0, 0, 1, 1], [], []>} : vector<8x8xf32>, vector<8x256xf32>, vector<8x256xf32> -> vector<8x256xf32>
    %c16_i32_52 = arith.constant 16 : i32
    %113 = tpu.dynamic_rotate %104 by %c16_i32_52 dim 1 : vector<8x256xf32>, i32 -> vector<8x256xf32>
    %114 = vector.extract_strided_slice %28 {offsets = [1, 0], sizes = [1, 256], strides = [1, 1]} : vector<9x256xf32> to vector<1x256xf32>
    %115 = vector.broadcast %114 : vector<1x256xf32> to vector<8x256xf32>
    %116 = arith.mulf %113, %115 : vector<8x256xf32>
    %c1_53 = arith.constant 1 : index
    %c0_54 = arith.constant 0 : index
    %c0_55 = arith.constant 0 : index
    %117 = vector.load %arg7[%c1_53, %c0_54, %c0_55] : memref<9x8x8xf32, #tpu.memory_space<vmem>>, vector<1x8x8xf32>
    %118 = vector.shape_cast %117 : vector<1x8x8xf32> to vector<8x8xf32>
    %cst_56 = arith.constant dense<0.000000e+00> : vector<8x256xf32>
    %119 = tpu.matmul %118, %116, %cst_56 {dimension_numbers = #tpu.dot_dimension_numbers<[1], [0], [0], [1], [0, 0, 1, 1], [], []>} : vector<8x8xf32>, vector<8x256xf32>, vector<8x256xf32> -> vector<8x256xf32>
    %120 = arith.addf %112, %119 : vector<8x256xf32>
    %c15_i32_57 = arith.constant 15 : i32
    %121 = tpu.dynamic_rotate %104 by %c15_i32_57 dim 1 : vector<8x256xf32>, i32 -> vector<8x256xf32>
    %122 = vector.extract_strided_slice %28 {offsets = [2, 0], sizes = [1, 256], strides = [1, 1]} : vector<9x256xf32> to vector<1x256xf32>
    %123 = vector.broadcast %122 : vector<1x256xf32> to vector<8x256xf32>
    %124 = arith.mulf %121, %123 : vector<8x256xf32>
    %c2_58 = arith.constant 2 : index
    %c0_59 = arith.constant 0 : index
    %c0_60 = arith.constant 0 : index
    %125 = vector.load %arg7[%c2_58, %c0_59, %c0_60] : memref<9x8x8xf32, #tpu.memory_space<vmem>>, vector<1x8x8xf32>
    %126 = vector.shape_cast %125 : vector<1x8x8xf32> to vector<8x8xf32>
    %cst_61 = arith.constant dense<0.000000e+00> : vector<8x256xf32>
    %127 = tpu.matmul %126, %124, %cst_61 {dimension_numbers = #tpu.dot_dimension_numbers<[1], [0], [0], [1], [0, 0, 1, 1], [], []>} : vector<8x8xf32>, vector<8x256xf32>, vector<8x256xf32> -> vector<8x256xf32>
    %128 = arith.addf %120, %127 : vector<8x256xf32>
    %c1_i32_62 = arith.constant 1 : i32
    %129 = tpu.dynamic_rotate %104 by %c1_i32_62 dim 1 : vector<8x256xf32>, i32 -> vector<8x256xf32>
    %130 = vector.extract_strided_slice %28 {offsets = [3, 0], sizes = [1, 256], strides = [1, 1]} : vector<9x256xf32> to vector<1x256xf32>
    %131 = vector.broadcast %130 : vector<1x256xf32> to vector<8x256xf32>
    %132 = arith.mulf %129, %131 : vector<8x256xf32>
    %c3_63 = arith.constant 3 : index
    %c0_64 = arith.constant 0 : index
    %c0_65 = arith.constant 0 : index
    %133 = vector.load %arg7[%c3_63, %c0_64, %c0_65] : memref<9x8x8xf32, #tpu.memory_space<vmem>>, vector<1x8x8xf32>
    %134 = vector.shape_cast %133 : vector<1x8x8xf32> to vector<8x8xf32>
    %cst_66 = arith.constant dense<0.000000e+00> : vector<8x256xf32>
    %135 = tpu.matmul %134, %132, %cst_66 {dimension_numbers = #tpu.dot_dimension_numbers<[1], [0], [0], [1], [0, 0, 1, 1], [], []>} : vector<8x8xf32>, vector<8x256xf32>, vector<8x256xf32> -> vector<8x256xf32>
    %136 = arith.addf %128, %135 : vector<8x256xf32>
    %c4_67 = arith.constant 4 : index
    %c0_68 = arith.constant 0 : index
    %c0_69 = arith.constant 0 : index
    %137 = vector.load %arg7[%c4_67, %c0_68, %c0_69] : memref<9x8x8xf32, #tpu.memory_space<vmem>>, vector<1x8x8xf32>
    %138 = vector.shape_cast %137 : vector<1x8x8xf32> to vector<8x8xf32>
    %cst_70 = arith.constant dense<0.000000e+00> : vector<8x256xf32>
    %139 = tpu.matmul %138, %104, %cst_70 {dimension_numbers = #tpu.dot_dimension_numbers<[1], [0], [0], [1], [0, 0, 1, 1], [], []>} : vector<8x8xf32>, vector<8x256xf32>, vector<8x256xf32> -> vector<8x256xf32>
    %140 = arith.addf %136, %139 : vector<8x256xf32>
    %c255_i32_71 = arith.constant 255 : i32
    %141 = tpu.dynamic_rotate %104 by %c255_i32_71 dim 1 : vector<8x256xf32>, i32 -> vector<8x256xf32>
    %142 = vector.extract_strided_slice %28 {offsets = [5, 0], sizes = [1, 256], strides = [1, 1]} : vector<9x256xf32> to vector<1x256xf32>
    %143 = vector.broadcast %142 : vector<1x256xf32> to vector<8x256xf32>
    %144 = arith.mulf %141, %143 : vector<8x256xf32>
    %c5_72 = arith.constant 5 : index
    %c0_73 = arith.constant 0 : index
    %c0_74 = arith.constant 0 : index
    %145 = vector.load %arg7[%c5_72, %c0_73, %c0_74] : memref<9x8x8xf32, #tpu.memory_space<vmem>>, vector<1x8x8xf32>
    %146 = vector.shape_cast %145 : vector<1x8x8xf32> to vector<8x8xf32>
    %cst_75 = arith.constant dense<0.000000e+00> : vector<8x256xf32>
    %147 = tpu.matmul %146, %144, %cst_75 {dimension_numbers = #tpu.dot_dimension_numbers<[1], [0], [0], [1], [0, 0, 1, 1], [], []>} : vector<8x8xf32>, vector<8x256xf32>, vector<8x256xf32> -> vector<8x256xf32>
    %148 = arith.addf %140, %147 : vector<8x256xf32>
    %c241_i32_76 = arith.constant 241 : i32
    %149 = tpu.dynamic_rotate %104 by %c241_i32_76 dim 1 : vector<8x256xf32>, i32 -> vector<8x256xf32>
    %150 = vector.extract_strided_slice %28 {offsets = [6, 0], sizes = [1, 256], strides = [1, 1]} : vector<9x256xf32> to vector<1x256xf32>
    %151 = vector.broadcast %150 : vector<1x256xf32> to vector<8x256xf32>
    %152 = arith.mulf %149, %151 : vector<8x256xf32>
    %c6_77 = arith.constant 6 : index
    %c0_78 = arith.constant 0 : index
    %c0_79 = arith.constant 0 : index
    %153 = vector.load %arg7[%c6_77, %c0_78, %c0_79] : memref<9x8x8xf32, #tpu.memory_space<vmem>>, vector<1x8x8xf32>
    %154 = vector.shape_cast %153 : vector<1x8x8xf32> to vector<8x8xf32>
    %cst_80 = arith.constant dense<0.000000e+00> : vector<8x256xf32>
    %155 = tpu.matmul %154, %152, %cst_80 {dimension_numbers = #tpu.dot_dimension_numbers<[1], [0], [0], [1], [0, 0, 1, 1], [], []>} : vector<8x8xf32>, vector<8x256xf32>, vector<8x256xf32> -> vector<8x256xf32>
    %156 = arith.addf %148, %155 : vector<8x256xf32>
    %c240_i32_81 = arith.constant 240 : i32
    %157 = tpu.dynamic_rotate %104 by %c240_i32_81 dim 1 : vector<8x256xf32>, i32 -> vector<8x256xf32>
    %158 = vector.extract_strided_slice %28 {offsets = [7, 0], sizes = [1, 256], strides = [1, 1]} : vector<9x256xf32> to vector<1x256xf32>
    %159 = vector.broadcast %158 : vector<1x256xf32> to vector<8x256xf32>
    %160 = arith.mulf %157, %159 : vector<8x256xf32>
    %c7_82 = arith.constant 7 : index
    %c0_83 = arith.constant 0 : index
    %c0_84 = arith.constant 0 : index
    %161 = vector.load %arg7[%c7_82, %c0_83, %c0_84] : memref<9x8x8xf32, #tpu.memory_space<vmem>>, vector<1x8x8xf32>
    %162 = vector.shape_cast %161 : vector<1x8x8xf32> to vector<8x8xf32>
    %cst_85 = arith.constant dense<0.000000e+00> : vector<8x256xf32>
    %163 = tpu.matmul %162, %160, %cst_85 {dimension_numbers = #tpu.dot_dimension_numbers<[1], [0], [0], [1], [0, 0, 1, 1], [], []>} : vector<8x8xf32>, vector<8x256xf32>, vector<8x256xf32> -> vector<8x256xf32>
    %164 = arith.addf %156, %163 : vector<8x256xf32>
    %c239_i32_86 = arith.constant 239 : i32
    %165 = tpu.dynamic_rotate %104 by %c239_i32_86 dim 1 : vector<8x256xf32>, i32 -> vector<8x256xf32>
    %166 = vector.extract_strided_slice %28 {offsets = [8, 0], sizes = [1, 256], strides = [1, 1]} : vector<9x256xf32> to vector<1x256xf32>
    %167 = vector.broadcast %166 : vector<1x256xf32> to vector<8x256xf32>
    %168 = arith.mulf %165, %167 : vector<8x256xf32>
    %c8_87 = arith.constant 8 : index
    %c0_88 = arith.constant 0 : index
    %c0_89 = arith.constant 0 : index
    %169 = vector.load %arg7[%c8_87, %c0_88, %c0_89] : memref<9x8x8xf32, #tpu.memory_space<vmem>>, vector<1x8x8xf32>
    %170 = vector.shape_cast %169 : vector<1x8x8xf32> to vector<8x8xf32>
    %cst_90 = arith.constant dense<0.000000e+00> : vector<8x256xf32>
    %171 = tpu.matmul %170, %168, %cst_90 {dimension_numbers = #tpu.dot_dimension_numbers<[1], [0], [0], [1], [0, 0, 1, 1], [], []>} : vector<8x8xf32>, vector<8x256xf32>, vector<8x256xf32> -> vector<8x256xf32>
    %172 = arith.addf %164, %171 : vector<8x256xf32>
    %173 = vector.broadcast %105 : vector<8x1xf32> to vector<8x256xf32>
    %174 = arith.addf %172, %173 : vector<8x256xf32>
    %175 = arith.negf %174 : vector<8x256xf32>
    %176 = math.exp %175 : vector<8x256xf32>
    %cst_91 = arith.constant 1.000000e+00 : f32
    %177 = vector.broadcast %cst_91 : f32 to vector<8x256xf32>
    %178 = arith.addf %177, %176 : vector<8x256xf32>
    %179 = arith.divf %177, %178 : vector<8x256xf32>
    %180 = arith.mulf %174, %179 : vector<8x256xf32>
    %c0_92 = arith.constant 0 : index
    %c0_93 = arith.constant 0 : index
    %c0_94 = arith.constant 0 : index
    %181 = vector.load %arg9[%c0_92, %c0_93, %c0_94] : memref<1x8x256xf32, #tpu.memory_space<vmem>>, vector<1x8x256xf32>
    %182 = vector.shape_cast %181 : vector<1x8x256xf32> to vector<8x256xf32>
    %183 = vector.shape_cast %180 : vector<8x256xf32> to vector<1x8x256xf32>
    tpu.vector_store %arg9[%c0_92, %c0_93, %c0_94], %183 {strides = array<i32>} : memref<1x8x256xf32, #tpu.memory_space<vmem>>, vector<1x8x256xf32>,
    return
  }
  func.func @transform_0(%arg0: i32) -> (i32, i32, i32) {
    %c0_i32 = arith.constant 0 : i32
    %c0_i32_0 = arith.constant 0 : i32
    %c0_i32_1 = arith.constant 0 : i32
    return %arg0, %c0_i32, %c0_i32_0 : i32, i32, i32
  }
  func.func @transform_1(%arg0: i32) -> (i32, i32) {
    %c0_i32 = arith.constant 0 : i32
    %c0_i32_0 = arith.constant 0 : i32
    %c0_i32_1 = arith.constant 0 : i32
    return %c0_i32, %c0_i32_0 : i32, i32
  }
  func.func @transform_2(%arg0: i32) -> (i32, i32) {
    %c0_i32 = arith.constant 0 : i32
    %c0_i32_0 = arith.constant 0 : i32
    %c0_i32_1 = arith.constant 0 : i32
    return %c0_i32, %c0_i32_0 : i32, i32
  }
  func.func @transform_3(%arg0: i32) -> (i32, i32) {
    %c0_i32 = arith.constant 0 : i32
    %c0_i32_0 = arith.constant 0 : i32
    %c0_i32_1 = arith.constant 0 : i32
    return %c0_i32, %c0_i32_0 : i32, i32
  }
  func.func @transform_4(%arg0: i32) -> (i32, i32, i32) {
    %c0_i32 = arith.constant 0 : i32
    %c0_i32_0 = arith.constant 0 : i32
    %c0_i32_1 = arith.constant 0 : i32
    %c0_i32_2 = arith.constant 0 : i32
    return %c0_i32, %c0_i32_0, %c0_i32_1 : i32, i32, i32
  }
  func.func @transform_5(%arg0: i32) -> (i32, i32) {
    %c0_i32 = arith.constant 0 : i32
    %c0_i32_0 = arith.constant 0 : i32
    %c0_i32_1 = arith.constant 0 : i32
    return %c0_i32, %c0_i32_0 : i32, i32
  }
  func.func @transform_6(%arg0: i32) -> (i32, i32, i32) {
    %c0_i32 = arith.constant 0 : i32
    %c0_i32_0 = arith.constant 0 : i32
    %c0_i32_1 = arith.constant 0 : i32
    %c0_i32_2 = arith.constant 0 : i32
    return %c0_i32, %c0_i32_0, %c0_i32_1 : i32, i32, i32
  }
  func.func @transform_7(%arg0: i32) -> (i32, i32) {
    %c0_i32 = arith.constant 0 : i32
    %c0_i32_0 = arith.constant 0 : i32
    %c0_i32_1 = arith.constant 0 : i32
    return %c0_i32, %c0_i32_0 : i32, i32
  }
  func.func @transform_8(%arg0: i32) -> (i32, i32, i32) {
    %c0_i32 = arith.constant 0 : i32
    %c0_i32_0 = arith.constant 0 : i32
    %c0_i32_1 = arith.constant 0 : i32
    return %arg0, %c0_i32, %c0_i32_0 : i32, i32, i32
  }
}

</mosaic_0001>

<llo_original>
// kernel: my_block_forward.1
$region0: #{my_block_forward.1}
  #allocation0 [shape = 'u32[]', space=smem, size = 0x4, offset = 0x4, fixed_abs, tag = 'smem constant byte address 0x4 - core index']
  #allocation1 [shape = 'u32[144,128]{1,0:T(1,128)}', space=vmem, size = 0x12000, scoped, tag = 'internal scratch']
  %s0 = inlined_call_operand.vmem [shape: f32[2,4,256], index: 0, kind: input, shape index: {}]
  %s1 = inlined_call_operand.vmem [shape: f32[4,256], index: 1, kind: input, shape index: {}]
  %s2 = inlined_call_operand.vmem [shape: f32[4,256], index: 2, kind: input, shape index: {}]
  %s3 = inlined_call_operand.vmem [shape: f32[9,256], index: 3, kind: input, shape index: {}]
  %s4 = inlined_call_operand.vmem [shape: f32[9,8,4], index: 4, kind: input, shape index: {}]
  %s5 = inlined_call_operand.vmem [shape: f32[8,1], index: 5, kind: input, shape index: {}]
  %s6 = inlined_call_operand.vmem [shape: f32[9,8,8], index: 6, kind: input, shape index: {}]
  %s7 = inlined_call_operand.vmem [shape: f32[8,1], index: 7, kind: input, shape index: {}]
  %s8 = inlined_call_operand.vmem [shape: f32[2,8,256], index: 8, kind: output, shape index: {}]
  %s9 = sld [smem:[#allocation0]]
  $region65: #{my_block_forward.1} parent=0
    _
  %s11 = ssub.s32 1, %s9
  %s12 = scalar_select 0, %s11, %s9
  loop: start=0, step=1, limit=4
  $region2: #{my_block_forward.1} parent=0 // loop_pre_header
    _
  $region3: #{my_block_forward.1} parent=0 // loop_header
    %s14 = sphi 0, %s18
    %p15 = scmp.ge.s32.totalorder %s14, 4
    %s24 = sphi 0, %s26
    %s27 = sphi 0, %s24
    %s28 = sphi 0, %s27
    %s44 = sphi 0, %s28
    %s48 = sphi 0, %s48
    %s50 = sphi 0, %s48
    %s51 = sphi 0, %s50
    %s65 = sphi 0, %s51
    %s69 = sphi 0, %s69
    %s71 = sphi 0, %s69
    %s72 = sphi 0, %s71
    %s86 = sphi 0, %s72
    %s90 = sphi 0, %s90
    %s92 = sphi 0, %s90
    %s93 = sphi 0, %s92
    %s107 = sphi 0, %s93
    %s111 = sphi 0, %s111
    %s113 = sphi 0, %s111
    %s114 = sphi 0, %s113
    %s128 = sphi 0, %s114
    %s132 = sphi 0, %s132
    %s134 = sphi 0, %s132
    %s135 = sphi 0, %s134
    %s149 = sphi 0, %s135
    %s153 = sphi 0, %s153
    %s155 = sphi 0, %s153
    %s156 = sphi 0, %s155
    %s170 = sphi 0, %s156
    %s174 = sphi 0, %s174
    %s176 = sphi 0, %s174
    %s177 = sphi 0, %s176
    %s191 = sphi 0, %s177
    %s197 = sphi 0, %s199
    %s200 = sphi 0, %s197
    %s201 = sphi 0, %s200
    %s217 = sphi 0, %s201
  $region4: #{my_block_forward.1} parent=0 // loop_header_branch
    %17 = sbr.rel (%p15) target = $region8
  $region5: #{my_block_forward.1} parent=0 // loop_body
    %s19 = ssub.s32 %s14, 1
    %s20 = ssub.s32 %s14, 2
    %s21 = sadd.s32 %s14, 1
    %s22 = ssub.s32 %s14, %s21
    %p23 = scmp.eq.s32.totalorder %s22, 0
    %s25 = sadd.s32 %s24, 1
    %s26 = scalar_select %p23, %s24, %s25
    %p29 = pneg %p23
    %p30 = scmp.eq.s32.totalorder %s14, 1
    %p31 = por %p29, %p30
    %p32 = scmp.ne.s32.totalorder %s24, %s27
    %p33 = scmp.eq.s32.totalorder %s14, 0
    %p34 = por %p32, %p33
    %p35 = scmp.ne.s32.totalorder %s24, %s27
    %p36 = scmp.eq.s32.totalorder %s19, 1
    %p37 = por %p35, %p36
    %p38 = scmp.ne.s32.totalorder %s27, %s28
    %p39 = scmp.eq.s32.totalorder %s19, 0
    %p40 = por %p38, %p39
    %p41 = scmp.ne.s32.totalorder %s27, %s28
    %p42 = scmp.eq.s32.totalorder %s20, 1
    %p43 = por %p41, %p42
    %p45 = scmp.ne.s32.totalorder %s28, %s44
    %p46 = scmp.eq.s32.totalorder %s20, 0
    %p47 = por %p45, %p46
    %s49 = sadd.s32 %s48, 1
    %p52 = scmp.eq.s32.totalorder %s14, 1
    %p53 = scmp.ne.s32.totalorder %s48, %s50
    %p54 = scmp.eq.s32.totalorder %s14, 0
    %p55 = por %p53, %p54
    %p56 = scmp.ne.s32.totalorder %s48, %s50
    %p57 = scmp.eq.s32.totalorder %s19, 1
    %p58 = por %p56, %p57
    %p59 = scmp.ne.s32.totalorder %s50, %s51
    %p60 = scmp.eq.s32.totalorder %s19, 0
    %p61 = por %p59, %p60
    %p62 = scmp.ne.s32.totalorder %s50, %s51
    %p63 = scmp.eq.s32.totalorder %s20, 1
    %p64 = por %p62, %p63
    %p66 = scmp.ne.s32.totalorder %s51, %s65
    %p67 = scmp.eq.s32.totalorder %s20, 0
    %p68 = por %p66, %p67
    %s70 = sadd.s32 %s69, 1
    %p73 = scmp.eq.s32.totalorder %s14, 1
    %p74 = scmp.ne.s32.totalorder %s69, %s71
    %p75 = scmp.eq.s32.totalorder %s14, 0
    %p76 = por %p74, %p75
    %p77 = scmp.ne.s32.totalorder %s69, %s71
    %p78 = scmp.eq.s32.totalorder %s19, 1
    %p79 = por %p77, %p78
    %p80 = scmp.ne.s32.totalorder %s71, %s72
    %p81 = scmp.eq.s32.totalorder %s19, 0
    %p82 = por %p80, %p81
    %p83 = scmp.ne.s32.totalorder %s71, %s72
    %p84 = scmp.eq.s32.totalorder %s20, 1
    %p85 = por %p83, %p84
    %p87 = scmp.ne.s32.totalorder %s72, %s86
    %p88 = scmp.eq.s32.totalorder %s20, 0
    %p89 = por %p87, %p88
    %s91 = sadd.s32 %s90, 1
    %p94 = scmp.eq.s32.totalorder %s14, 1
    %p95 = scmp.ne.s32.totalorder %s90, %s92
    %p96 = scmp.eq.s32.totalorder %s14, 0
    %p97 = por %p95, %p96
    %p98 = scmp.ne.s32.totalorder %s90, %s92
    %p99 = scmp.eq.s32.totalorder %s19, 1
    %p100 = por %p98, %p99
    %p101 = scmp.ne.s32.totalorder %s92, %s93
    %p102 = scmp.eq.s32.totalorder %s19, 0
    %p103 = por %p101, %p102
    %p104 = scmp.ne.s32.totalorder %s92, %s93
    %p105 = scmp.eq.s32.totalorder %s20, 1
    %p106 = por %p104, %p105
    %p108 = scmp.ne.s32.totalorder %s93, %s107
    %p109 = scmp.eq.s32.totalorder %s20, 0
    %p110 = por %p108, %p109
    %s112 = sadd.s32 %s111, 1
    %p115 = scmp.eq.s32.totalorder %s14, 1
    %p116 = scmp.ne.s32.totalorder %s111, %s113
    %p117 = scmp.eq.s32.totalorder %s14, 0
    %p118 = por %p116, %p117
    %p119 = scmp.ne.s32.totalorder %s111, %s113
    %p120 = scmp.eq.s32.totalorder %s19, 1
    %p121 = por %p119, %p120
    %p122 = scmp.ne.s32.totalorder %s113, %s114
    %p123 = scmp.eq.s32.totalorder %s19, 0
    %p124 = por %p122, %p123
    %p125 = scmp.ne.s32.totalorder %s113, %s114
    %p126 = scmp.eq.s32.totalorder %s20, 1
    %p127 = por %p125, %p126
    %p129 = scmp.ne.s32.totalorder %s114, %s128
    %p130 = scmp.eq.s32.totalorder %s20, 0
    %p131 = por %p129, %p130
    %s133 = sadd.s32 %s132, 1
    %p136 = scmp.eq.s32.totalorder %s14, 1
    %p137 = scmp.ne.s32.totalorder %s132, %s134
    %p138 = scmp.eq.s32.totalorder %s14, 0
    %p139 = por %p137, %p138
    %p140 = scmp.ne.s32.totalorder %s132, %s134
    %p141 = scmp.eq.s32.totalorder %s19, 1
    %p142 = por %p140, %p141
    %p143 = scmp.ne.s32.totalorder %s134, %s135
    %p144 = scmp.eq.s32.totalorder %s19, 0
    %p145 = por %p143, %p144
    %p146 = scmp.ne.s32.totalorder %s134, %s135
    %p147 = scmp.eq.s32.totalorder %s20, 1
    %p148 = por %p146, %p147
    %p150 = scmp.ne.s32.totalorder %s135, %s149
    %p151 = scmp.eq.s32.totalorder %s20, 0
    %p152 = por %p150, %p151
    %s154 = sadd.s32 %s153, 1
    %p157 = scmp.eq.s32.totalorder %s14, 1
    %p158 = scmp.ne.s32.totalorder %s153, %s155
    %p159 = scmp.eq.s32.totalorder %s14, 0
    %p160 = por %p158, %p159
    %p161 = scmp.ne.s32.totalorder %s153, %s155
    %p162 = scmp.eq.s32.totalorder %s19, 1
    %p163 = por %p161, %p162
    %p164 = scmp.ne.s32.totalorder %s155, %s156
    %p165 = scmp.eq.s32.totalorder %s19, 0
    %p166 = por %p164, %p165
    %p167 = scmp.ne.s32.totalorder %s155, %s156
    %p168 = scmp.eq.s32.totalorder %s20, 1
    %p169 = por %p167, %p168
    %p171 = scmp.ne.s32.totalorder %s156, %s170
    %p172 = scmp.eq.s32.totalorder %s20, 0
    %p173 = por %p171, %p172
    %s175 = sadd.s32 %s174, 1
    %p178 = scmp.eq.s32.totalorder %s14, 1
    %p179 = scmp.ne.s32.totalorder %s174, %s176
    %p180 = scmp.eq.s32.totalorder %s14, 0
    %p181 = por %p179, %p180
    %p182 = scmp.ne.s32.totalorder %s174, %s176
    %p183 = scmp.eq.s32.totalorder %s19, 1
    %p184 = por %p182, %p183
    %p185 = scmp.ne.s32.totalorder %s176, %s177
    %p186 = scmp.eq.s32.totalorder %s19, 0
    %p187 = por %p185, %p186
    %p188 = scmp.ne.s32.totalorder %s176, %s177
    %p189 = scmp.eq.s32.totalorder %s20, 1
    %p190 = por %p188, %p189
    %p192 = scmp.ne.s32.totalorder %s177, %s191
    %p193 = scmp.eq.s32.totalorder %s20, 0
    %p194 = por %p192, %p193
    %s195 = ssub.s32 %s14, %s21
    %p196 = scmp.eq.s32.totalorder %s195, 0
    %s198 = sadd.s32 %s197, 1
    %s199 = scalar_select %p196, %s197, %s198
    %p202 = pneg %p196
    %p203 = scmp.eq.s32.totalorder %s14, 1
    %p204 = por %p202, %p203
    %p205 = scmp.ne.s32.totalorder %s197, %s200
    %p206 = scmp.eq.s32.totalorder %s14, 0
    %p207 = por %p205, %p206
    %p208 = scmp.ne.s32.totalorder %s197, %s200
    %p209 = scmp.eq.s32.totalorder %s19, 1
    %p210 = por %p208, %p209
    %p211 = scmp.ne.s32.totalorder %s200, %s201
    %p212 = scmp.eq.s32.totalorder %s19, 0
    %p213 = por %p211, %p212
    %p214 = scmp.ne.s32.totalorder %s200, %s201
    %p215 = scmp.eq.s32.totalorder %s20, 1
    %p216 = por %p214, %p215
    %p218 = scmp.ne.s32.totalorder %s201, %s217
    %p219 = scmp.eq.s32.totalorder %s20, 0
    %p220 = por %p218, %p219
    %p221 = scmp.le.s32.totalorder 1, %s14
    %p222 = scmp.lt.s32.totalorder %s14, 3
    %p223 = pnand %p221, %p222
    %p224 = pneg %p223
    // Predicated region
    $region9: #{my_block_forward.1} parent=5 // pred_check
      _
    $region10: #{my_block_forward.1} parent=5 // pred_check_branch
      %226 = sbr.rel (%p223) target = $region12
    $region11: #{my_block_forward.1} parent=5 // pred_region
      %s227 = ssub.s32 %s14, 1
      // Predicated region
      $region13: #{my_block_forward.1} parent=11 // pred_check
        %p228 = pneg %p61
      $region14: #{my_block_forward.1} parent=11 // pred_check_branch
        %230 = sbr.rel (%p228) target = $region16
      $region15: #{my_block_forward.1} parent=11 // pred_region
        _
      $region16: #{my_block_forward.1} parent=11 // pred_fallthru
        _
      // Predicated region
      $region17: #{my_block_forward.1} parent=11 // pred_check
        %p231 = pneg %p82
      $region18: #{my_block_forward.1} parent=11 // pred_check_branch
        %233 = sbr.rel (%p231) target = $region20
      $region19: #{my_block_forward.1} parent=11 // pred_region
        _
      $region20: #{my_block_forward.1} parent=11 // pred_fallthru
        _
      // Predicated region
      $region21: #{my_block_forward.1} parent=11 // pred_check
        %p234 = pneg %p103
      $region22: #{my_block_forward.1} parent=11 // pred_check_branch
        %236 = sbr.rel (%p234) target = $region24
      $region23: #{my_block_forward.1} parent=11 // pred_region
        _
      $region24: #{my_block_forward.1} parent=11 // pred_fallthru
        _
      // Predicated region
      $region25: #{my_block_forward.1} parent=11 // pred_check
        %p237 = pneg %p124
      $region26: #{my_block_forward.1} parent=11 // pred_check_branch
        %239 = sbr.rel (%p237) target = $region28
      $region27: #{my_block_forward.1} parent=11 // pred_region
        _
      $region28: #{my_block_forward.1} parent=11 // pred_fallthru
        _
      // Predicated region
      $region29: #{my_block_forward.1} parent=11 // pred_check
        %p240 = pneg %p145
      $region30: #{my_block_forward.1} parent=11 // pred_check_branch
        %242 = sbr.rel (%p240) target = $region32
      $region31: #{my_block_forward.1} parent=11 // pred_region
        _
      $region32: #{my_block_forward.1} parent=11 // pred_fallthru
        _
      // Predicated region
      $region33: #{my_block_forward.1} parent=11 // pred_check
        %p243 = pneg %p166
      $region34: #{my_block_forward.1} parent=11 // pred_check_branch
        %245 = sbr.rel (%p243) target = $region36
      $region35: #{my_block_forward.1} parent=11 // pred_region
        _
      $region36: #{my_block_forward.1} parent=11 // pred_fallthru
        _
      // Predicated region
      $region37: #{my_block_forward.1} parent=11 // pred_check
        %p246 = pneg %p187
      $region38: #{my_block_forward.1} parent=11 // pred_check_branch
        %248 = sbr.rel (%p246) target = $region40
      $region39: #{my_block_forward.1} parent=11 // pred_region
        _
      $region40: #{my_block_forward.1} parent=11 // pred_fallthru
        _
    $region12: #{my_block_forward.1} parent=5 // pred_fallthru
      _
    %p249 = scmp.lt.s32.totalorder %s14, 2
    // Predicated region
    $region41: #{my_block_forward.1} parent=5 // pred_check
      %p250 = pneg %p249
    $region42: #{my_block_forward.1} parent=5 // pred_check_branch
      %252 = sbr.rel (%p250) target = $region44
    $region43: #{my_block_forward.1} parent=5 // pred_region
      // Predicated region
      $region45: #{my_block_forward.1} parent=43 // pred_check
        %p253 = pneg %p34
      $region46: #{my_block_forward.1} parent=43 // pred_check_branch
        %255 = sbr.rel (%p253) target = $region48
      $region47: #{my_block_forward.1} parent=43 // pred_region
        %p256 = scmp.lt.s32.totalorder %s14, 1
        %s257 = scalar_select %p256, %s14, 1
        %s258 = smul.addr %s257, 2
        %s259 = smul.addr %s258, 4
        %s260 = scalar_lea.vmem %s0, %s259
      $region48: #{my_block_forward.1} parent=43 // pred_fallthru
        _
    $region44: #{my_block_forward.1} parent=5 // pred_fallthru
      _
    %p261 = scmp.le.s32.totalorder 1, %s14
    %p262 = scmp.lt.s32.totalorder %s14, 3
    %p263 = pnand %p261, %p262
    %p264 = pneg %p263
    // Predicated region
    $region49: #{my_block_forward.1} parent=5 // pred_check
      _
    $region50: #{my_block_forward.1} parent=5 // pred_check_branch
      %266 = sbr.rel (%p263) target = $region52
    $region51: #{my_block_forward.1} parent=5 // pred_region
      %s267 = ssub.s32 %s14, 1
      %p268 = scmp.lt.s32.totalorder %s19, 1
      %s269 = scalar_select %p268, %s19, 1
      %s270 = smul.addr %s269, 2
      %s271 = smul.addr %s270, 4
      %s272 = scalar_lea.vmem %s0, %s271
      %p273 = pneg %p40
      %p274 = pneg %p37
      %p275 = pneg %p61
      %p276 = pneg %p58
      %p277 = pneg %p82
      %p278 = pneg %p79
      %p279 = pneg %p103
      %p280 = pneg %p100
      %p281 = pneg %p124
      %p282 = pneg %p121
      %p283 = pneg %p145
      %p284 = pneg %p142
      %p285 = pneg %p166
      %p286 = pneg %p163
      %p287 = pneg %p187
      %p288 = pneg %p184
      %p289 = pneg %p213
      %p290 = pneg %p210
      %p291 = scmp.lt.s32.totalorder %s19, 1
      %s292 = scalar_select %p291, %s19, 1
      %s293 = smul.addr %s292, 2
      %s294 = smul.addr %s293, 8
      %s295 = scalar_lea.vmem %s8, %s294
      %p296 = scmp.lt.s32.totalorder %s19, 1
      %s297 = scalar_select %p296, %s19, 1
      %s298 = smul.addr %s297, 2
      %s299 = smul.addr %s298, 4
      %s300 = scalar_lea.vmem %s0, %s299
      %p301 = scmp.lt.s32.totalorder %s19, 1
      %s302 = scalar_select %p301, %s19, 1
      %s303 = smul.addr %s302, 2
      %s304 = smul.addr %s303, 8
      %s305 = scalar_lea.vmem %s8, %s304
      %v306 = vld [vmem:[%s1] sm:$0xff]
      %v307 = vld [vmem:[%s2] sm:$0xff]
      %v308 = vld [vmem:[%s300] sm:$0xff]
      %v310 = vcombine.high %v308, %v308
      %vm312 = vcmask 1043456
      %v313 = vsel %vm312, %v308, 0.0
      %v314 = vsel %vm312, %v310, 0.0
      %v315 = vadd.f32 %v313, %v314
      %316 = vadd.xlane.f32.xlu0 %v315
      %v317 = vpop.xlane.xlu0 %316
      %v318 = vsel %vm312, %v317, 0.0
      %v319 = vrot.slane %v318, 4
      %v320 = vadd.f32 %v318, %v319
      %v321 = vrot.slane %v320, 2
      %v322 = vadd.f32 %v320, %v321
      %v323 = vrot.slane %v322, 1
      %v324 = vadd.f32 %v322, %v323
      %v325 = vmul.f32 %v308, %v308
      %v327 = vcombine.high %v325, %v325
      %v329 = vsel %vm312, %v325, 0.0
      %v330 = vsel %vm312, %v327, 0.0
      %v331 = vadd.f32 %v329, %v330
      %332 = vadd.xlane.f32.xlu0 %v331
      %v333 = vpop.xlane.xlu0 %332
      %v334 = vsel %vm312, %v333, 0.0
      %v335 = vrot.slane %v334, 4
      %v336 = vadd.f32 %v334, %v335
      %v337 = vrot.slane %v336, 2
      %v338 = vadd.f32 %v336, %v337
      %v339 = vrot.slane %v338, 1
      %v340 = vadd.f32 %v338, %v339
      %v341 = vmul.f32 %v324, 0.0009765625
      %v342 = vmul.f32 %v340, 0.0009765625
      %v343 = vmul.f32 %v341, %v341
      %v344 = vsub.f32 %v342, %v343
      %v345 = vsub.f32 %v308, %v341
      %v346 = vadd.f32 %v344, 1e-05
      %v347 = vrsqrt.pop %v346
      %v348 = vmul.f32 %v345, %v347
      %v349 = vmul.f32 %v348, %v306
      %v350 = vadd.f32 %v349, %v307
      %v351 = vld [vmem:[%s3] sm:$0xff]
      %v352 = vld [vmem:[%s3 + $0x8] sm:$0xff]
      %v353 = vld [vmem:[%s3 + $0x10] sm:$0x1]
      %v354 = vld [vmem:[%s3 + $0x18] sm:$0x1]
      %v355 = vld [vmem:[%s5] sm:$0xff]
      %v357 = vcombine.high %v350, %v350
      %359 = vrot.lane.b32.xlu0 %v350, 17
      %v360 = vpop.permute.xlu0 %359
      %361 = vrot.lane.b32.xlu0 %v357, 17
      %v362 = vpop.permute.xlu0 %361
      %v363 = vlaneseq
      %v364 = vand.u32 %v363, 127
      %vm365 = vcmp.lt.s32.totalorder %v364, 17
      %v366 = vsel %vm365, %v360, %v362
      %v367 = vsel %vm365, %v362, %v360
      %v368 = vlaneseq
      %v369 = vshrl.u32 %v368, 7
      %v370 = vsub.s32 0, %v369
      %v371 = vrot.slane %v351, %v370
      %v372 = vlaneseq
      %v373 = vshrl.u32 %v372, 7
      %v374 = vsub.s32 0, %v373
      %v375 = vrot.slane %v352, %v374
      %v376 = vmul.f32 %v367, %v371
      %v377 = vmul.f32 %v366, %v375
      %v378 = vld [vmem:[%s4] sm:$0xff]
      %379 = vrot.lane.b32.xlu0 %v350, 16
      %v380 = vpop.permute.xlu0 %379
      %381 = vrot.lane.b32.xlu0 %v357, 16
      %v382 = vpop.permute.xlu0 %381
      %vm383 = vcmp.lt.s32.totalorder %v364, 16
      %v384 = vsel %vm383, %v380, %v382
      %v385 = vsel %vm383, %v382, %v380
      %v386 = vlaneseq
      %v387 = vshrl.u32 %v386, 7
      %v388 = vsub.s32 1, %v387
      %v389 = vrot.slane %v351, %v388
      %v390 = vlaneseq
      %v391 = vshrl.u32 %v390, 7
      %v392 = vsub.s32 1, %v391
      %v393 = vrot.slane %v352, %v392
      %v394 = vmul.f32 %v385, %v389
      %v395 = vmul.f32 %v384, %v393
      %s396 = scalar_lea.vmem %s4, 8
      %v397 = vld [vmem:[%s396] sm:$0xff]
      %vm398 = vcmask 31744
      %v400 = vsel %vm398, %v397, 0
      %v403 = vsel %vm312, %v394, 0
      %v406 = vsel %vm312, %v395, 0
      %408 = vmatprep.subr.mxu0 %v406
      %409 = vmatpush1.msra.mxu0 %v403
      %410 = vmatprep.subr.mxu0 0.0
      %411 = vmatpush1.msra.mxu0 0.0
      %412 = vmatprep.subr.mxu0 0.0
      %413 = vmatpush1.msra.mxu0 0.0
      %414 = vmatprep.subr.mxu0 0.0
      %415 = vmatpush1.msra.mxu0 0.0
      %416 = vmatprep.subr.mxu0 0.0
      %417 = vmatpush1.msra.mxu0 0.0
      %418 = vmatprep.subr.mxu0 0.0
      %419 = vmatpush1.msra.mxu0 0.0
      %420 = vmatprep.subr.mxu0 0.0
      %421 = vmatpush1.msra.mxu0 0.0
      %422 = vmatprep.subr.mxu0 0.0
      %423 = vmatpush1.msra.mxu0 0.0
      %424 = vmatprep.subr.mxu0 0.0
      %425 = vmatpush1.msra.mxu0 0.0
      %426 = vmatprep.subr.mxu0 0.0
      %427 = vmatpush1.msra.mxu0 0.0
      %428 = vmatprep.subr.mxu0 0.0
      %429 = vmatpush1.msra.mxu0 0.0
      %430 = vmatprep.subr.mxu0 0.0
      %431 = vmatpush1.msra.mxu0 0.0
      %432 = vmatprep.subr.mxu0 0.0
      %433 = vmatpush1.msra.mxu0 0.0
      %434 = vmatprep.subr.mxu0 0.0
      %435 = vmatpush1.msra.mxu0 0.0
      %436 = vmatprep.subr.mxu0 0.0
      %437 = vmatpush1.msra.mxu0 0.0
      %438 = vmatprep.subr.mxu0 0.0
      %439 = vmatpush1.msra.mxu0 0.0
      %440 = vmatprep.subr.mxu0 0.0
      %441 = vmatpush1.msra.mxu0 0.0
      %442 = vmatprep.subr.mxu0 0.0
      %443 = vmatpush1.msra.mxu0 0.0
      %444 = vmatprep.subr.mxu0 0.0
      %445 = vmatpush1.msra.mxu0 0.0
      %446 = vmatprep.subr.mxu0 0.0
      %447 = vmatpush1.msra.mxu0 0.0
      %448 = vmatprep.subr.mxu0 0.0
      %449 = vmatpush1.msra.mxu0 0.0
      %450 = vmatprep.subr.mxu0 0.0
      %451 = vmatpush1.msra.mxu0 0.0
      %452 = vmatprep.subr.mxu0 0.0
      %453 = vmatpush1.msra.mxu0 0.0
      %454 = vmatprep.subr.mxu0 0.0
      %455 = vmatpush1.msra.mxu0 0.0
      %456 = vmatprep.subr.mxu0 0.0
      %457 = vmatpush1.msra.mxu0 0.0
      %458 = vmatprep.subr.mxu0 0.0
      %459 = vmatpush1.msra.mxu0 0.0
      %460 = vmatprep.subr.mxu0 0.0
      %461 = vmatpush1.msra.mxu0 0.0
      %462 = vmatprep.subr.mxu0 0.0
      %463 = vmatpush1.msra.mxu0 0.0
      %464 = vmatprep.subr.mxu0 0.0
      %465 = vmatpush1.msra.mxu0 0.0
      %466 = vmatprep.subr.mxu0 0.0
      %467 = vmatpush1.msra.mxu0 0.0
      %468 = vmatprep.subr.mxu0 0.0
      %469 = vmatpush1.msra.mxu0 0.0
      %470 = vmatprep.subr.mxu0 0.0
      %471 = vmatpush1.msra.mxu0 0.0
      %472 = vmatprep.mubr.f32.mxu0 0.0
      %473 = vmatmul.mubr.f32.gmra.mrb[0].mxu0 %v400
      %v474 = vpop.f32.mrb[0].mxu0
      %v475 = vadd.f32 0.0, %v474
      %v476 = vpop.f32.mrb[0].mxu0
      %v477 = vadd.f32 0.0, %v476
      %478 = vdwg.mxu0
      %v480 = vsel %vm398, %v378, 0
      %v483 = vsel %vm312, %v376, 0
      %v486 = vsel %vm312, %v377, 0
      %488 = vmatprep.subr.mxu0 %v486
      %489 = vmatpush1.msra.mxu0 %v483
      %490 = vmatprep.subr.mxu0 0.0
      %491 = vmatpush1.msra.mxu0 0.0
      %492 = vmatprep.subr.mxu0 0.0
      %493 = vmatpush1.msra.mxu0 0.0
      %494 = vmatprep.subr.mxu0 0.0
      %495 = vmatpush1.msra.mxu0 0.0
      %496 = vmatprep.subr.mxu0 0.0
      %497 = vmatpush1.msra.mxu0 0.0
      %498 = vmatprep.subr.mxu0 0.0
      %499 = vmatpush1.msra.mxu0 0.0
      %500 = vmatprep.subr.mxu0 0.0
      %501 = vmatpush1.msra.mxu0 0.0
      %502 = vmatprep.subr.mxu0 0.0
      %503 = vmatpush1.msra.mxu0 0.0
      %504 = vmatprep.subr.mxu0 0.0
      %505 = vmatpush1.msra.mxu0 0.0
      %506 = vmatprep.subr.mxu0 0.0
      %507 = vmatpush1.msra.mxu0 0.0
      %508 = vmatprep.subr.mxu0 0.0
      %509 = vmatpush1.msra.mxu0 0.0
      %510 = vmatprep.subr.mxu0 0.0
      %511 = vmatpush1.msra.mxu0 0.0
      %512 = vmatprep.subr.mxu0 0.0
      %513 = vmatpush1.msra.mxu0 0.0
      %514 = vmatprep.subr.mxu0 0.0
      %515 = vmatpush1.msra.mxu0 0.0
      %516 = vmatprep.subr.mxu0 0.0
      %517 = vmatpush1.msra.mxu0 0.0
      %518 = vmatprep.subr.mxu0 0.0
      %519 = vmatpush1.msra.mxu0 0.0
      %520 = vmatprep.subr.mxu0 0.0
      %521 = vmatpush1.msra.mxu0 0.0
      %522 = vmatprep.subr.mxu0 0.0
      %523 = vmatpush1.msra.mxu0 0.0
      %524 = vmatprep.subr.mxu0 0.0
      %525 = vmatpush1.msra.mxu0 0.0
      %526 = vmatprep.subr.mxu0 0.0
      %527 = vmatpush1.msra.mxu0 0.0
      %528 = vmatprep.subr.mxu0 0.0
      %529 = vmatpush1.msra.mxu0 0.0
      %530 = vmatprep.subr.mxu0 0.0
      %531 = vmatpush1.msra.mxu0 0.0
      %532 = vmatprep.subr.mxu0 0.0
      %533 = vmatpush1.msra.mxu0 0.0
      %534 = vmatprep.subr.mxu0 0.0
      %535 = vmatpush1.msra.mxu0 0.0
      %536 = vmatprep.subr.mxu0 0.0
      %537 = vmatpush1.msra.mxu0 0.0
      %538 = vmatprep.subr.mxu0 0.0
      %539 = vmatpush1.msra.mxu0 0.0
      %540 = vmatprep.subr.mxu0 0.0
      %541 = vmatpush1.msra.mxu0 0.0
      %542 = vmatprep.subr.mxu0 0.0
      %543 = vmatpush1.msra.mxu0 0.0
      %544 = vmatprep.subr.mxu0 0.0
      %545 = vmatpush1.msra.mxu0 0.0
      %546 = vmatprep.subr.mxu0 0.0
      %547 = vmatpush1.msra.mxu0 0.0
      %548 = vmatprep.subr.mxu0 0.0
      %549 = vmatpush1.msra.mxu0 0.0
      %550 = vmatprep.subr.mxu0 0.0
      %551 = vmatpush1.msra.mxu0 0.0
      %552 = vmatprep.mubr.f32.mxu0 0.0
      %553 = vmatmul.mubr.f32.gmra.mrb[0].mxu0 %v480
      %v554 = vpop.f32.mrb[0].mxu0
      %v555 = vadd.f32 %v475, %v554
      %v556 = vpop.f32.mrb[0].mxu0
      %v557 = vadd.f32 %v477, %v556
      %558 = vdwg.mxu0
      %559 = vrot.lane.b32.xlu0 %v350, 15
      %v560 = vpop.permute.xlu0 %559
      %561 = vrot.lane.b32.xlu0 %v357, 15
      %v562 = vpop.permute.xlu0 %561
      %vm563 = vcmp.lt.s32.totalorder %v364, 15
      %v564 = vsel %vm563, %v560, %v562
      %v565 = vsel %vm563, %v562, %v560
      %v566 = vlaneseq
      %v567 = vshrl.u32 %v566, 7
      %v568 = vsub.s32 2, %v567
      %v569 = vrot.slane %v351, %v568
      %v570 = vlaneseq
      %v571 = vshrl.u32 %v570, 7
      %v572 = vsub.s32 2, %v571
      %v573 = vrot.slane %v352, %v572
      %v574 = vmul.f32 %v565, %v569
      %v575 = vmul.f32 %v564, %v573
      %s576 = scalar_lea.vmem %s4, 16
      %v577 = vld [vmem:[%s576] sm:$0xff]
      %v579 = vsel %vm398, %v577, 0
      %v582 = vsel %vm312, %v574, 0
      %v585 = vsel %vm312, %v575, 0
      %587 = vmatprep.subr.mxu0 %v585
      %588 = vmatpush1.msra.mxu0 %v582
      %589 = vmatprep.subr.mxu0 0.0
      %590 = vmatpush1.msra.mxu0 0.0
      %591 = vmatprep.subr.mxu0 0.0
      %592 = vmatpush1.msra.mxu0 0.0
      %593 = vmatprep.subr.mxu0 0.0
      %594 = vmatpush1.msra.mxu0 0.0
      %595 = vmatprep.subr.mxu0 0.0
      %596 = vmatpush1.msra.mxu0 0.0
      %597 = vmatprep.subr.mxu0 0.0
      %598 = vmatpush1.msra.mxu0 0.0
      %599 = vmatprep.subr.mxu0 0.0
      %600 = vmatpush1.msra.mxu0 0.0
      %601 = vmatprep.subr.mxu0 0.0
      %602 = vmatpush1.msra.mxu0 0.0
      %603 = vmatprep.subr.mxu0 0.0
      %604 = vmatpush1.msra.mxu0 0.0
      %605 = vmatprep.subr.mxu0 0.0
      %606 = vmatpush1.msra.mxu0 0.0
      %607 = vmatprep.subr.mxu0 0.0
      %608 = vmatpush1.msra.mxu0 0.0
      %609 = vmatprep.subr.mxu0 0.0
      %610 = vmatpush1.msra.mxu0 0.0
      %611 = vmatprep.subr.mxu0 0.0
      %612 = vmatpush1.msra.mxu0 0.0
      %613 = vmatprep.subr.mxu0 0.0
      %614 = vmatpush1.msra.mxu0 0.0
      %615 = vmatprep.subr.mxu0 0.0
      %616 = vmatpush1.msra.mxu0 0.0
      %617 = vmatprep.subr.mxu0 0.0
      %618 = vmatpush1.msra.mxu0 0.0
      %619 = vmatprep.subr.mxu0 0.0
      %620 = vmatpush1.msra.mxu0 0.0
      %621 = vmatprep.subr.mxu0 0.0
      %622 = vmatpush1.msra.mxu0 0.0
      %623 = vmatprep.subr.mxu0 0.0
      %624 = vmatpush1.msra.mxu0 0.0
      %625 = vmatprep.subr.mxu0 0.0
      %626 = vmatpush1.msra.mxu0 0.0
      %627 = vmatprep.subr.mxu0 0.0
      %628 = vmatpush1.msra.mxu0 0.0
      %629 = vmatprep.subr.mxu0 0.0
      %630 = vmatpush1.msra.mxu0 0.0
      %631 = vmatprep.subr.mxu0 0.0
      %632 = vmatpush1.msra.mxu0 0.0
      %633 = vmatprep.subr.mxu0 0.0
      %634 = vmatpush1.msra.mxu0 0.0
      %635 = vmatprep.subr.mxu0 0.0
      %636 = vmatpush1.msra.mxu0 0.0
      %637 = vmatprep.subr.mxu0 0.0
      %638 = vmatpush1.msra.mxu0 0.0
      %639 = vmatprep.subr.mxu0 0.0
      %640 = vmatpush1.msra.mxu0 0.0
      %641 = vmatprep.subr.mxu0 0.0
      %642 = vmatpush1.msra.mxu0 0.0
      %643 = vmatprep.subr.mxu0 0.0
      %644 = vmatpush1.msra.mxu0 0.0
      %645 = vmatprep.subr.mxu0 0.0
      %646 = vmatpush1.msra.mxu0 0.0
      %647 = vmatprep.subr.mxu0 0.0
      %648 = vmatpush1.msra.mxu0 0.0
      %649 = vmatprep.subr.mxu0 0.0
      %650 = vmatpush1.msra.mxu0 0.0
      %651 = vmatprep.mubr.f32.mxu0 0.0
      %652 = vmatmul.mubr.f32.gmra.mrb[0].mxu0 %v579
      %v653 = vpop.f32.mrb[0].mxu0
      %v654 = vadd.f32 0.0, %v653
      %v655 = vpop.f32.mrb[0].mxu0
      %v656 = vadd.f32 0.0, %v655
      %657 = vdwg.mxu0
      %v658 = vadd.f32 %v555, %v654
      %v659 = vadd.f32 %v557, %v656
      %660 = vrot.lane.b32.xlu0 %v350, 1
      %v661 = vpop.permute.xlu0 %660
      %662 = vrot.lane.b32.xlu0 %v357, 1
      %v663 = vpop.permute.xlu0 %662
      %vm664 = vcmp.lt.s32.totalorder %v364, 1
      %v665 = vsel %vm664, %v661, %v663
      %v666 = vsel %vm664, %v663, %v661
      %v667 = vlaneseq
      %v668 = vshrl.u32 %v667, 7
      %v669 = vsub.s32 3, %v668
      %v670 = vrot.slane %v351, %v669
      %v671 = vlaneseq
      %v672 = vshrl.u32 %v671, 7
      %v673 = vsub.s32 3, %v672
      %v674 = vrot.slane %v352, %v673
      %v675 = vmul.f32 %v666, %v670
      %v676 = vmul.f32 %v665, %v674
      %s677 = scalar_lea.vmem %s4, 24
      %v678 = vld [vmem:[%s677] sm:$0xff]
      %v680 = vsel %vm398, %v678, 0
      %v683 = vsel %vm312, %v675, 0
      %v686 = vsel %vm312, %v676, 0
      %688 = vmatprep.subr.mxu0 %v686
      %689 = vmatpush1.msra.mxu0 %v683
      %690 = vmatprep.subr.mxu0 0.0
      %691 = vmatpush1.msra.mxu0 0.0
      %692 = vmatprep.subr.mxu0 0.0
      %693 = vmatpush1.msra.mxu0 0.0
      %694 = vmatprep.subr.mxu0 0.0
      %695 = vmatpush1.msra.mxu0 0.0
      %696 = vmatprep.subr.mxu0 0.0
      %697 = vmatpush1.msra.mxu0 0.0
      %698 = vmatprep.subr.mxu0 0.0
      %699 = vmatpush1.msra.mxu0 0.0
      %700 = vmatprep.subr.mxu0 0.0
      %701 = vmatpush1.msra.mxu0 0.0
      %702 = vmatprep.subr.mxu0 0.0
      %703 = vmatpush1.msra.mxu0 0.0
      %704 = vmatprep.subr.mxu0 0.0
      %705 = vmatpush1.msra.mxu0 0.0
      %706 = vmatprep.subr.mxu0 0.0
      %707 = vmatpush1.msra.mxu0 0.0
      %708 = vmatprep.subr.mxu0 0.0
      %709 = vmatpush1.msra.mxu0 0.0
      %710 = vmatprep.subr.mxu0 0.0
      %711 = vmatpush1.msra.mxu0 0.0
      %712 = vmatprep.subr.mxu0 0.0
      %713 = vmatpush1.msra.mxu0 0.0
      %714 = vmatprep.subr.mxu0 0.0
      %715 = vmatpush1.msra.mxu0 0.0
      %716 = vmatprep.subr.mxu0 0.0
      %717 = vmatpush1.msra.mxu0 0.0
      %718 = vmatprep.subr.mxu0 0.0
      %719 = vmatpush1.msra.mxu0 0.0
      %720 = vmatprep.subr.mxu0 0.0
      %721 = vmatpush1.msra.mxu0 0.0
      %722 = vmatprep.subr.mxu0 0.0
      %723 = vmatpush1.msra.mxu0 0.0
      %724 = vmatprep.subr.mxu0 0.0
      %725 = vmatpush1.msra.mxu0 0.0
      %726 = vmatprep.subr.mxu0 0.0
      %727 = vmatpush1.msra.mxu0 0.0
      %728 = vmatprep.subr.mxu0 0.0
      %729 = vmatpush1.msra.mxu0 0.0
      %730 = vmatprep.subr.mxu0 0.0
      %731 = vmatpush1.msra.mxu0 0.0
      %732 = vmatprep.subr.mxu0 0.0
      %733 = vmatpush1.msra.mxu0 0.0
      %734 = vmatprep.subr.mxu0 0.0
      %735 = vmatpush1.msra.mxu0 0.0
      %736 = vmatprep.subr.mxu0 0.0
      %737 = vmatpush1.msra.mxu0 0.0
      %738 = vmatprep.subr.mxu0 0.0
      %739 = vmatpush1.msra.mxu0 0.0
      %740 = vmatprep.subr.mxu0 0.0
      %741 = vmatpush1.msra.mxu0 0.0
      %742 = vmatprep.subr.mxu0 0.0
      %743 = vmatpush1.msra.mxu0 0.0
      %744 = vmatprep.subr.mxu0 0.0
      %745 = vmatpush1.msra.mxu0 0.0
      %746 = vmatprep.subr.mxu0 0.0
      %747 = vmatpush1.msra.mxu0 0.0
      %748 = vmatprep.subr.mxu0 0.0
      %749 = vmatpush1.msra.mxu0 0.0
      %750 = vmatprep.subr.mxu0 0.0
      %751 = vmatpush1.msra.mxu0 0.0
      %752 = vmatprep.mubr.f32.mxu0 0.0
      %753 = vmatmul.mubr.f32.gmra.mrb[0].mxu0 %v680
      %v754 = vpop.f32.mrb[0].mxu0
      %v755 = vadd.f32 0.0, %v754
      %v756 = vpop.f32.mrb[0].mxu0
      %v757 = vadd.f32 0.0, %v756
      %758 = vdwg.mxu0
      %v759 = vadd.f32 %v658, %v755
      %v760 = vadd.f32 %v659, %v757
      %s761 = scalar_lea.vmem %s4, 32
      %v762 = vld [vmem:[%s761] sm:$0xff]
      %v764 = vsel %vm398, %v762, 0
      %v766 = vsel %vm312, %v350, 0
      %v768 = vsel %vm312, %v357, 0
      %770 = vmatprep.subr.mxu0 %v768
      %771 = vmatpush1.msra.mxu0 %v766
      %772 = vmatprep.subr.mxu0 0.0
      %773 = vmatpush1.msra.mxu0 0.0
      %774 = vmatprep.subr.mxu0 0.0
      %775 = vmatpush1.msra.mxu0 0.0
      %776 = vmatprep.subr.mxu0 0.0
      %777 = vmatpush1.msra.mxu0 0.0
      %778 = vmatprep.subr.mxu0 0.0
      %779 = vmatpush1.msra.mxu0 0.0
      %780 = vmatprep.subr.mxu0 0.0
      %781 = vmatpush1.msra.mxu0 0.0
      %782 = vmatprep.subr.mxu0 0.0
      %783 = vmatpush1.msra.mxu0 0.0
      %784 = vmatprep.subr.mxu0 0.0
      %785 = vmatpush1.msra.mxu0 0.0
      %786 = vmatprep.subr.mxu0 0.0
      %787 = vmatpush1.msra.mxu0 0.0
      %788 = vmatprep.subr.mxu0 0.0
      %789 = vmatpush1.msra.mxu0 0.0
      %790 = vmatprep.subr.mxu0 0.0
      %791 = vmatpush1.msra.mxu0 0.0
      %792 = vmatprep.subr.mxu0 0.0
      %793 = vmatpush1.msra.mxu0 0.0
      %794 = vmatprep.subr.mxu0 0.0
      %795 = vmatpush1.msra.mxu0 0.0
      %796 = vmatprep.subr.mxu0 0.0
      %797 = vmatpush1.msra.mxu0 0.0
      %798 = vmatprep.subr.mxu0 0.0
      %799 = vmatpush1.msra.mxu0 0.0
      %800 = vmatprep.subr.mxu0 0.0
      %801 = vmatpush1.msra.mxu0 0.0
      %802 = vmatprep.subr.mxu0 0.0
      %803 = vmatpush1.msra.mxu0 0.0
      %804 = vmatprep.subr.mxu0 0.0
      %805 = vmatpush1.msra.mxu0 0.0
      %806 = vmatprep.subr.mxu0 0.0
      %807 = vmatpush1.msra.mxu0 0.0
      %808 = vmatprep.subr.mxu0 0.0
      %809 = vmatpush1.msra.mxu0 0.0
      %810 = vmatprep.subr.mxu0 0.0
      %811 = vmatpush1.msra.mxu0 0.0
      %812 = vmatprep.subr.mxu0 0.0
      %813 = vmatpush1.msra.mxu0 0.0
      %814 = vmatprep.subr.mxu0 0.0
      %815 = vmatpush1.msra.mxu0 0.0
      %816 = vmatprep.subr.mxu0 0.0
      %817 = vmatpush1.msra.mxu0 0.0
      %818 = vmatprep.subr.mxu0 0.0
      %819 = vmatpush1.msra.mxu0 0.0
      %820 = vmatprep.subr.mxu0 0.0
      %821 = vmatpush1.msra.mxu0 0.0
      %822 = vmatprep.subr.mxu0 0.0
      %823 = vmatpush1.msra.mxu0 0.0
      %824 = vmatprep.subr.mxu0 0.0
      %825 = vmatpush1.msra.mxu0 0.0
      %826 = vmatprep.subr.mxu0 0.0
      %827 = vmatpush1.msra.mxu0 0.0
      %828 = vmatprep.subr.mxu0 0.0
      %829 = vmatpush1.msra.mxu0 0.0
      %830 = vmatprep.subr.mxu0 0.0
      %831 = vmatpush1.msra.mxu0 0.0
      %832 = vmatprep.subr.mxu0 0.0
      %833 = vmatpush1.msra.mxu0 0.0
      %834 = vmatprep.mubr.f32.mxu0 0.0
      %835 = vmatmul.mubr.f32.gmra.mrb[0].mxu0 %v764
      %v836 = vpop.f32.mrb[0].mxu0
      %v837 = vadd.f32 0.0, %v836
      %v838 = vpop.f32.mrb[0].mxu0
      %v839 = vadd.f32 0.0, %v838
      %840 = vdwg.mxu0
      %v841 = vadd.f32 %v759, %v837
      %v842 = vadd.f32 %v760, %v839
      %843 = vrot.lane.b32.xlu0 %v350, 127
      %v844 = vpop.permute.xlu0 %843
      %845 = vrot.lane.b32.xlu0 %v357, 127
      %v846 = vpop.permute.xlu0 %845
      %vm847 = vcmp.lt.s32.totalorder %v364, 127
      %v848 = vsel %vm847, %v844, %v846
      %v849 = vsel %vm847, %v846, %v844
      %v850 = vlaneseq
      %v851 = vshrl.u32 %v850, 7
      %v852 = vsub.s32 5, %v851
      %v853 = vrot.slane %v351, %v852
      %v854 = vlaneseq
      %v855 = vshrl.u32 %v854, 7
      %v856 = vsub.s32 5, %v855
      %v857 = vrot.slane %v352, %v856
      %v858 = vmul.f32 %v848, %v853
      %v859 = vmul.f32 %v849, %v857
      %s860 = scalar_lea.vmem %s4, 40
      %v861 = vld [vmem:[%s860] sm:$0xff]
      %v863 = vsel %vm398, %v861, 0
      %v866 = vsel %vm312, %v858, 0
      %v869 = vsel %vm312, %v859, 0
      %871 = vmatprep.subr.mxu0 %v869
      %872 = vmatpush1.msra.mxu0 %v866
      %873 = vmatprep.subr.mxu0 0.0
      %874 = vmatpush1.msra.mxu0 0.0
      %875 = vmatprep.subr.mxu0 0.0
      %876 = vmatpush1.msra.mxu0 0.0
      %877 = vmatprep.subr.mxu0 0.0
      %878 = vmatpush1.msra.mxu0 0.0
      %879 = vmatprep.subr.mxu0 0.0
      %880 = vmatpush1.msra.mxu0 0.0
      %881 = vmatprep.subr.mxu0 0.0
      %882 = vmatpush1.msra.mxu0 0.0
      %883 = vmatprep.subr.mxu0 0.0
      %884 = vmatpush1.msra.mxu0 0.0
      %885 = vmatprep.subr.mxu0 0.0
      %886 = vmatpush1.msra.mxu0 0.0
      %887 = vmatprep.subr.mxu0 0.0
      %888 = vmatpush1.msra.mxu0 0.0
      %889 = vmatprep.subr.mxu0 0.0
      %890 = vmatpush1.msra.mxu0 0.0
      %891 = vmatprep.subr.mxu0 0.0
      %892 = vmatpush1.msra.mxu0 0.0
      %893 = vmatprep.subr.mxu0 0.0
      %894 = vmatpush1.msra.mxu0 0.0
      %895 = vmatprep.subr.mxu0 0.0
      %896 = vmatpush1.msra.mxu0 0.0
      %897 = vmatprep.subr.mxu0 0.0
      %898 = vmatpush1.msra.mxu0 0.0
      %899 = vmatprep.subr.mxu0 0.0
      %900 = vmatpush1.msra.mxu0 0.0
      %901 = vmatprep.subr.mxu0 0.0
      %902 = vmatpush1.msra.mxu0 0.0
      %903 = vmatprep.subr.mxu0 0.0
      %904 = vmatpush1.msra.mxu0 0.0
      %905 = vmatprep.subr.mxu0 0.0
      %906 = vmatpush1.msra.mxu0 0.0
      %907 = vmatprep.subr.mxu0 0.0
      %908 = vmatpush1.msra.mxu0 0.0
      %909 = vmatprep.subr.mxu0 0.0
      %910 = vmatpush1.msra.mxu0 0.0
      %911 = vmatprep.subr.mxu0 0.0
      %912 = vmatpush1.msra.mxu0 0.0
      %913 = vmatprep.subr.mxu0 0.0
      %914 = vmatpush1.msra.mxu0 0.0
      %915 = vmatprep.subr.mxu0 0.0
      %916 = vmatpush1.msra.mxu0 0.0
      %917 = vmatprep.subr.mxu0 0.0
      %918 = vmatpush1.msra.mxu0 0.0
      %919 = vmatprep.subr.mxu0 0.0
      %920 = vmatpush1.msra.mxu0 0.0
      %921 = vmatprep.subr.mxu0 0.0
      %922 = vmatpush1.msra.mxu0 0.0
      %923 = vmatprep.subr.mxu0 0.0
      %924 = vmatpush1.msra.mxu0 0.0
      %925 = vmatprep.subr.mxu0 0.0
      %926 = vmatpush1.msra.mxu0 0.0
      %927 = vmatprep.subr.mxu0 0.0
      %928 = vmatpush1.msra.mxu0 0.0
      %929 = vmatprep.subr.mxu0 0.0
      %930 = vmatpush1.msra.mxu0 0.0
      %931 = vmatprep.subr.mxu0 0.0
      %932 = vmatpush1.msra.mxu0 0.0
      %933 = vmatprep.subr.mxu0 0.0
      %934 = vmatpush1.msra.mxu0 0.0
      %935 = vmatprep.mubr.f32.mxu0 0.0
      %936 = vmatmul.mubr.f32.gmra.mrb[0].mxu0 %v863
      %v937 = vpop.f32.mrb[0].mxu0
      %v938 = vadd.f32 0.0, %v937
      %v939 = vpop.f32.mrb[0].mxu0
      %v940 = vadd.f32 0.0, %v939
      %941 = vdwg.mxu0
      %v942 = vadd.f32 %v841, %v938
      %v943 = vadd.f32 %v842, %v940
      %944 = vrot.lane.b32.xlu0 %v350, 113
      %v945 = vpop.permute.xlu0 %944
      %946 = vrot.lane.b32.xlu0 %v357, 113
      %v947 = vpop.permute.xlu0 %946
      %vm948 = vcmp.lt.s32.totalorder %v364, 113
      %v949 = vsel %vm948, %v945, %v947
      %v950 = vsel %vm948, %v947, %v945
      %v951 = vlaneseq
      %v952 = vshrl.u32 %v951, 7
      %v953 = vsub.s32 6, %v952
      %v954 = vrot.slane %v351, %v953
      %v955 = vlaneseq
      %v956 = vshrl.u32 %v955, 7
      %v957 = vsub.s32 6, %v956
      %v958 = vrot.slane %v352, %v957
      %v959 = vmul.f32 %v949, %v954
      %v960 = vmul.f32 %v950, %v958
      %s961 = scalar_lea.vmem %s4, 48
      %v962 = vld [vmem:[%s961] sm:$0xff]
      %v964 = vsel %vm398, %v962, 0
      %v967 = vsel %vm312, %v959, 0
      %v970 = vsel %vm312, %v960, 0
      %972 = vmatprep.subr.mxu0 %v970
      %973 = vmatpush1.msra.mxu0 %v967
      %974 = vmatprep.subr.mxu0 0.0
      %975 = vmatpush1.msra.mxu0 0.0
      %976 = vmatprep.subr.mxu0 0.0
      %977 = vmatpush1.msra.mxu0 0.0
      %978 = vmatprep.subr.mxu0 0.0
      %979 = vmatpush1.msra.mxu0 0.0
      %980 = vmatprep.subr.mxu0 0.0
      %981 = vmatpush1.msra.mxu0 0.0
      %982 = vmatprep.subr.mxu0 0.0
      %983 = vmatpush1.msra.mxu0 0.0
      %984 = vmatprep.subr.mxu0 0.0
      %985 = vmatpush1.msra.mxu0 0.0
      %986 = vmatprep.subr.mxu0 0.0
      %987 = vmatpush1.msra.mxu0 0.0
      %988 = vmatprep.subr.mxu0 0.0
      %989 = vmatpush1.msra.mxu0 0.0
      %990 = vmatprep.subr.mxu0 0.0
      %991 = vmatpush1.msra.mxu0 0.0
      %992 = vmatprep.subr.mxu0 0.0
      %993 = vmatpush1.msra.mxu0 0.0
      %994 = vmatprep.subr.mxu0 0.0
      %995 = vmatpush1.msra.mxu0 0.0
      %996 = vmatprep.subr.mxu0 0.0
      %997 = vmatpush1.msra.mxu0 0.0
      %998 = vmatprep.subr.mxu0 0.0
      %999 = vmatpush1.msra.mxu0 0.0
      %1000 = vmatprep.subr.mxu0 0.0
      %1001 = vmatpush1.msra.mxu0 0.0
      %1002 = vmatprep.subr.mxu0 0.0
      %1003 = vmatpush1.msra.mxu0 0.0
      %1004 = vmatprep.subr.mxu0 0.0
      %1005 = vmatpush1.msra.mxu0 0.0
      %1006 = vmatprep.subr.mxu0 0.0
      %1007 = vmatpush1.msra.mxu0 0.0
      %1008 = vmatprep.subr.mxu0 0.0
      %1009 = vmatpush1.msra.mxu0 0.0
      %1010 = vmatprep.subr.mxu0 0.0
      %1011 = vmatpush1.msra.mxu0 0.0
      %1012 = vmatprep.subr.mxu0 0.0
      %1013 = vmatpush1.msra.mxu0 0.0
      %1014 = vmatprep.subr.mxu0 0.0
      %1015 = vmatpush1.msra.mxu0 0.0
      %1016 = vmatprep.subr.mxu0 0.0
      %1017 = vmatpush1.msra.mxu0 0.0
      %1018 = vmatprep.subr.mxu0 0.0
      %1019 = vmatpush1.msra.mxu0 0.0
      %1020 = vmatprep.subr.mxu0 0.0
      %1021 = vmatpush1.msra.mxu0 0.0
      %1022 = vmatprep.subr.mxu0 0.0
      %1023 = vmatpush1.msra.mxu0 0.0
      %1024 = vmatprep.subr.mxu0 0.0
      %1025 = vmatpush1.msra.mxu0 0.0
      %1026 = vmatprep.subr.mxu0 0.0
      %1027 = vmatpush1.msra.mxu0 0.0
      %1028 = vmatprep.subr.mxu0 0.0
      %1029 = vmatpush1.msra.mxu0 0.0
      %1030 = vmatprep.subr.mxu0 0.0
      %1031 = vmatpush1.msra.mxu0 0.0
      %1032 = vmatprep.subr.mxu0 0.0
      %1033 = vmatpush1.msra.mxu0 0.0
      %1034 = vmatprep.subr.mxu0 0.0
      %1035 = vmatpush1.msra.mxu0 0.0
      %1036 = vmatprep.mubr.f32.mxu0 0.0
      %1037 = vmatmul.mubr.f32.gmra.mrb[0].mxu0 %v964
      %v1038 = vpop.f32.mrb[0].mxu0
      %v1039 = vadd.f32 0.0, %v1038
      %v1040 = vpop.f32.mrb[0].mxu0
      %v1041 = vadd.f32 0.0, %v1040
      %1042 = vdwg.mxu0
      %v1043 = vadd.f32 %v942, %v1039
      %v1044 = vadd.f32 %v943, %v1041
      %1045 = vrot.lane.b32.xlu0 %v350, 112
      %v1046 = vpop.permute.xlu0 %1045
      %1047 = vrot.lane.b32.xlu0 %v357, 112
      %v1048 = vpop.permute.xlu0 %1047
      %vm1049 = vcmp.lt.s32.totalorder %v364, 112
      %v1050 = vsel %vm1049, %v1046, %v1048
      %v1051 = vsel %vm1049, %v1048, %v1046
      %v1052 = vlaneseq
      %v1053 = vshrl.u32 %v1052, 7
      %v1054 = vsub.s32 7, %v1053
      %v1055 = vrot.slane %v351, %v1054
      %v1056 = vlaneseq
      %v1057 = vshrl.u32 %v1056, 7
      %v1058 = vsub.s32 7, %v1057
      %v1059 = vrot.slane %v352, %v1058
      %v1060 = vmul.f32 %v1050, %v1055
      %v1061 = vmul.f32 %v1051, %v1059
      %s1062 = scalar_lea.vmem %s4, 56
      %v1063 = vld [vmem:[%s1062] sm:$0xff]
      %v1065 = vsel %vm398, %v1063, 0
      %v1068 = vsel %vm312, %v1060, 0
      %v1071 = vsel %vm312, %v1061, 0
      %1073 = vmatprep.subr.mxu0 %v1071
      %1074 = vmatpush1.msra.mxu0 %v1068
      %1075 = vmatprep.subr.mxu0 0.0
      %1076 = vmatpush1.msra.mxu0 0.0
      %1077 = vmatprep.subr.mxu0 0.0
      %1078 = vmatpush1.msra.mxu0 0.0
      %1079 = vmatprep.subr.mxu0 0.0
      %1080 = vmatpush1.msra.mxu0 0.0
      %1081 = vmatprep.subr.mxu0 0.0
      %1082 = vmatpush1.msra.mxu0 0.0
      %1083 = vmatprep.subr.mxu0 0.0
      %1084 = vmatpush1.msra.mxu0 0.0
      %1085 = vmatprep.subr.mxu0 0.0
      %1086 = vmatpush1.msra.mxu0 0.0
      %1087 = vmatprep.subr.mxu0 0.0
      %1088 = vmatpush1.msra.mxu0 0.0
      %1089 = vmatprep.subr.mxu0 0.0
      %1090 = vmatpush1.msra.mxu0 0.0
      %1091 = vmatprep.subr.mxu0 0.0
      %1092 = vmatpush1.msra.mxu0 0.0
      %1093 = vmatprep.subr.mxu0 0.0
      %1094 = vmatpush1.msra.mxu0 0.0
      %1095 = vmatprep.subr.mxu0 0.0
      %1096 = vmatpush1.msra.mxu0 0.0
      %1097 = vmatprep.subr.mxu0 0.0
      %1098 = vmatpush1.msra.mxu0 0.0
      %1099 = vmatprep.subr.mxu0 0.0
      %1100 = vmatpush1.msra.mxu0 0.0
      %1101 = vmatprep.subr.mxu0 0.0
      %1102 = vmatpush1.msra.mxu0 0.0
      %1103 = vmatprep.subr.mxu0 0.0
      %1104 = vmatpush1.msra.mxu0 0.0
      %1105 = vmatprep.subr.mxu0 0.0
      %1106 = vmatpush1.msra.mxu0 0.0
      %1107 = vmatprep.subr.mxu0 0.0
      %1108 = vmatpush1.msra.mxu0 0.0
      %1109 = vmatprep.subr.mxu0 0.0
      %1110 = vmatpush1.msra.mxu0 0.0
      %1111 = vmatprep.subr.mxu0 0.0
      %1112 = vmatpush1.msra.mxu0 0.0
      %1113 = vmatprep.subr.mxu0 0.0
      %1114 = vmatpush1.msra.mxu0 0.0
      %1115 = vmatprep.subr.mxu0 0.0
      %1116 = vmatpush1.msra.mxu0 0.0
      %1117 = vmatprep.subr.mxu0 0.0
      %1118 = vmatpush1.msra.mxu0 0.0
      %1119 = vmatprep.subr.mxu0 0.0
      %1120 = vmatpush1.msra.mxu0 0.0
      %1121 = vmatprep.subr.mxu0 0.0
      %1122 = vmatpush1.msra.mxu0 0.0
      %1123 = vmatprep.subr.mxu0 0.0
      %1124 = vmatpush1.msra.mxu0 0.0
      %1125 = vmatprep.subr.mxu0 0.0
      %1126 = vmatpush1.msra.mxu0 0.0
      %1127 = vmatprep.subr.mxu0 0.0
      %1128 = vmatpush1.msra.mxu0 0.0
      %1129 = vmatprep.subr.mxu0 0.0
      %1130 = vmatpush1.msra.mxu0 0.0
      %1131 = vmatprep.subr.mxu0 0.0
      %1132 = vmatpush1.msra.mxu0 0.0
      %1133 = vmatprep.subr.mxu0 0.0
      %1134 = vmatpush1.msra.mxu0 0.0
      %1135 = vmatprep.subr.mxu0 0.0
      %1136 = vmatpush1.msra.mxu0 0.0
      %1137 = vmatprep.mubr.f32.mxu0 0.0
      %1138 = vmatmul.mubr.f32.gmra.mrb[0].mxu0 %v1065
      %v1139 = vpop.f32.mrb[0].mxu0
      %v1140 = vadd.f32 0.0, %v1139
      %v1141 = vpop.f32.mrb[0].mxu0
      %v1142 = vadd.f32 0.0, %v1141
      %1143 = vdwg.mxu0
      %v1144 = vadd.f32 %v1043, %v1140
      %v1145 = vadd.f32 %v1044, %v1142
      %1146 = vrot.lane.b32.xlu0 %v350, 111
      %v1147 = vpop.permute.xlu0 %1146
      %1148 = vrot.lane.b32.xlu0 %v357, 111
      %v1149 = vpop.permute.xlu0 %1148
      %vm1150 = vcmp.lt.s32.totalorder %v364, 111
      %v1151 = vsel %vm1150, %v1147, %v1149
      %v1152 = vsel %vm1150, %v1149, %v1147
      %v1153 = vlaneseq
      %v1154 = vshrl.u32 %v1153, 7
      %v1155 = vsub.s32 0, %v1154
      %v1156 = vrot.slane %v353, %v1155
      %v1157 = vlaneseq
      %v1158 = vshrl.u32 %v1157, 7
      %v1159 = vsub.s32 0, %v1158
      %v1160 = vrot.slane %v354, %v1159
      %v1161 = vmul.f32 %v1151, %v1156
      %v1162 = vmul.f32 %v1152, %v1160
      %s1163 = scalar_lea.vmem %s4, 64
      %v1164 = vld [vmem:[%s1163] sm:$0xff]
      %v1166 = vsel %vm398, %v1164, 0
      %v1169 = vsel %vm312, %v1161, 0
      %v1172 = vsel %vm312, %v1162, 0
      %1174 = vmatprep.subr.mxu0 %v1172
      %1175 = vmatpush1.msra.mxu0 %v1169
      %1176 = vmatprep.subr.mxu0 0.0
      %1177 = vmatpush1.msra.mxu0 0.0
      %1178 = vmatprep.subr.mxu0 0.0
      %1179 = vmatpush1.msra.mxu0 0.0
      %1180 = vmatprep.subr.mxu0 0.0
      %1181 = vmatpush1.msra.mxu0 0.0
      %1182 = vmatprep.subr.mxu0 0.0
      %1183 = vmatpush1.msra.mxu0 0.0
      %1184 = vmatprep.subr.mxu0 0.0
      %1185 = vmatpush1.msra.mxu0 0.0
      %1186 = vmatprep.subr.mxu0 0.0
      %1187 = vmatpush1.msra.mxu0 0.0
      %1188 = vmatprep.subr.mxu0 0.0
      %1189 = vmatpush1.msra.mxu0 0.0
      %1190 = vmatprep.subr.mxu0 0.0
      %1191 = vmatpush1.msra.mxu0 0.0
      %1192 = vmatprep.subr.mxu0 0.0
      %1193 = vmatpush1.msra.mxu0 0.0
      %1194 = vmatprep.subr.mxu0 0.0
      %1195 = vmatpush1.msra.mxu0 0.0
      %1196 = vmatprep.subr.mxu0 0.0
      %1197 = vmatpush1.msra.mxu0 0.0
      %1198 = vmatprep.subr.mxu0 0.0
      %1199 = vmatpush1.msra.mxu0 0.0
      %1200 = vmatprep.subr.mxu0 0.0
      %1201 = vmatpush1.msra.mxu0 0.0
      %1202 = vmatprep.subr.mxu0 0.0
      %1203 = vmatpush1.msra.mxu0 0.0
      %1204 = vmatprep.subr.mxu0 0.0
      %1205 = vmatpush1.msra.mxu0 0.0
      %1206 = vmatprep.subr.mxu0 0.0
      %1207 = vmatpush1.msra.mxu0 0.0
      %1208 = vmatprep.subr.mxu0 0.0
      %1209 = vmatpush1.msra.mxu0 0.0
      %1210 = vmatprep.subr.mxu0 0.0
      %1211 = vmatpush1.msra.mxu0 0.0
      %1212 = vmatprep.subr.mxu0 0.0
      %1213 = vmatpush1.msra.mxu0 0.0
      %1214 = vmatprep.subr.mxu0 0.0
      %1215 = vmatpush1.msra.mxu0 0.0
      %1216 = vmatprep.subr.mxu0 0.0
      %1217 = vmatpush1.msra.mxu0 0.0
      %1218 = vmatprep.subr.mxu0 0.0
      %1219 = vmatpush1.msra.mxu0 0.0
      %1220 = vmatprep.subr.mxu0 0.0
      %1221 = vmatpush1.msra.mxu0 0.0
      %1222 = vmatprep.subr.mxu0 0.0
      %1223 = vmatpush1.msra.mxu0 0.0
      %1224 = vmatprep.subr.mxu0 0.0
      %1225 = vmatpush1.msra.mxu0 0.0
      %1226 = vmatprep.subr.mxu0 0.0
      %1227 = vmatpush1.msra.mxu0 0.0
      %1228 = vmatprep.subr.mxu0 0.0
      %1229 = vmatpush1.msra.mxu0 0.0
      %1230 = vmatprep.subr.mxu0 0.0
      %1231 = vmatpush1.msra.mxu0 0.0
      %1232 = vmatprep.subr.mxu0 0.0
      %1233 = vmatpush1.msra.mxu0 0.0
      %1234 = vmatprep.subr.mxu0 0.0
      %1235 = vmatpush1.msra.mxu0 0.0
      %1236 = vmatprep.subr.mxu0 0.0
      %1237 = vmatpush1.msra.mxu0 0.0
      %1238 = vmatprep.mubr.f32.mxu0 0.0
      %1239 = vmatmul.mubr.f32.gmra.mrb[0].mxu0 %v1166
      %v1240 = vpop.f32.mrb[0].mxu0
      %v1241 = vadd.f32 0.0, %v1240
      %v1242 = vpop.f32.mrb[0].mxu0
      %v1243 = vadd.f32 0.0, %v1242
      %1244 = vdwg.mxu0
      %v1245 = vadd.f32 %v1144, %v1241
      %v1246 = vadd.f32 %v1145, %v1243
      %1248 = vset.pattern.permute.xlu0 0
      %1249 = vperm.xlu0 %1248, %v355
      %v1250 = vpop.permute.xlu0 %1249
      %v1252 = vadd.f32 %v1245, %v1250
      %v1253 = vadd.f32 %v1246, %v1250
      %v1254 = vxor.u32 %v1252, 2147483648
      %v1255 = vxor.u32 %v1253, 2147483648
      %v1256 = vmul.f32 %v1254, 1.442695
      %v1257 = vpow.pop %v1256
      %v1258 = vmul.f32 %v1255, 1.442695
      %v1259 = vpow.pop %v1258
      %v1260 = vadd.f32 %v1257, 1.0
      %v1261 = vadd.f32 %v1259, 1.0
      %v1262 = vrcp.pop %v1260
      %v1263 = vmul.f32 1.0, %v1262
      %v1264 = vrcp.pop %v1261
      %v1265 = vmul.f32 1.0, %v1264
      %v1266 = vmul.f32 %v1252, %v1263
      %v1267 = vmul.f32 %v1253, %v1265
      %v1268 = vld [vmem:[%s7] sm:$0xff]
      %1269 = vrot.lane.b32.xlu0 %v1266, 17
      %v1270 = vpop.permute.xlu0 %1269
      %1271 = vrot.lane.b32.xlu0 %v1267, 17
      %v1272 = vpop.permute.xlu0 %1271
      %v1273 = vsel %vm365, %v1270, %v1272
      %v1274 = vsel %vm365, %v1272, %v1270
      %v1275 = vmul.f32 %v1274, %v371
      %v1276 = vmul.f32 %v1273, %v375
      %v1277 = vld [vmem:[%s6] sm:$0xff]
      %1278 = vrot.lane.b32.xlu0 %v1266, 16
      %v1279 = vpop.permute.xlu0 %1278
      %1280 = vrot.lane.b32.xlu0 %v1267, 16
      %v1281 = vpop.permute.xlu0 %1280
      %v1282 = vsel %vm383, %v1279, %v1281
      %v1283 = vsel %vm383, %v1281, %v1279
      %v1284 = vmul.f32 %v1283, %v389
      %v1285 = vmul.f32 %v1282, %v393
      %s1286 = scalar_lea.vmem %s6, 8
      %v1287 = vld [vmem:[%s1286] sm:$0xff]
      %vm1288 = vcmask 64512
      %v1290 = vsel %vm1288, %v1287, 0
      %1292 = vmatprep.subr.mxu0 %v1285
      %1293 = vmatpush1.msra.mxu0 %v1284
      %1294 = vmatprep.subr.mxu0 0.0
      %1295 = vmatpush1.msra.mxu0 0.0
      %1296 = vmatprep.subr.mxu0 0.0
      %1297 = vmatpush1.msra.mxu0 0.0
      %1298 = vmatprep.subr.mxu0 0.0
      %1299 = vmatpush1.msra.mxu0 0.0
      %1300 = vmatprep.subr.mxu0 0.0
      %1301 = vmatpush1.msra.mxu0 0.0
      %1302 = vmatprep.subr.mxu0 0.0
      %1303 = vmatpush1.msra.mxu0 0.0
      %1304 = vmatprep.subr.mxu0 0.0
      %1305 = vmatpush1.msra.mxu0 0.0
      %1306 = vmatprep.subr.mxu0 0.0
      %1307 = vmatpush1.msra.mxu0 0.0
      %1308 = vmatprep.subr.mxu0 0.0
      %1309 = vmatpush1.msra.mxu0 0.0
      %1310 = vmatprep.subr.mxu0 0.0
      %1311 = vmatpush1.msra.mxu0 0.0
      %1312 = vmatprep.subr.mxu0 0.0
      %1313 = vmatpush1.msra.mxu0 0.0
      %1314 = vmatprep.subr.mxu0 0.0
      %1315 = vmatpush1.msra.mxu0 0.0
      %1316 = vmatprep.subr.mxu0 0.0
      %1317 = vmatpush1.msra.mxu0 0.0
      %1318 = vmatprep.subr.mxu0 0.0
      %1319 = vmatpush1.msra.mxu0 0.0
      %1320 = vmatprep.subr.mxu0 0.0
      %1321 = vmatpush1.msra.mxu0 0.0
      %1322 = vmatprep.subr.mxu0 0.0
      %1323 = vmatpush1.msra.mxu0 0.0
      %1324 = vmatprep.subr.mxu0 0.0
      %1325 = vmatpush1.msra.mxu0 0.0
      %1326 = vmatprep.subr.mxu0 0.0
      %1327 = vmatpush1.msra.mxu0 0.0
      %1328 = vmatprep.subr.mxu0 0.0
      %1329 = vmatpush1.msra.mxu0 0.0
      %1330 = vmatprep.subr.mxu0 0.0
      %1331 = vmatpush1.msra.mxu0 0.0
      %1332 = vmatprep.subr.mxu0 0.0
      %1333 = vmatpush1.msra.mxu0 0.0
      %1334 = vmatprep.subr.mxu0 0.0
      %1335 = vmatpush1.msra.mxu0 0.0
      %1336 = vmatprep.subr.mxu0 0.0
      %1337 = vmatpush1.msra.mxu0 0.0
      %1338 = vmatprep.subr.mxu0 0.0
      %1339 = vmatpush1.msra.mxu0 0.0
      %1340 = vmatprep.subr.mxu0 0.0
      %1341 = vmatpush1.msra.mxu0 0.0
      %1342 = vmatprep.subr.mxu0 0.0
      %1343 = vmatpush1.msra.mxu0 0.0
      %1344 = vmatprep.subr.mxu0 0.0
      %1345 = vmatpush1.msra.mxu0 0.0
      %1346 = vmatprep.subr.mxu0 0.0
      %1347 = vmatpush1.msra.mxu0 0.0
      %1348 = vmatprep.subr.mxu0 0.0
      %1349 = vmatpush1.msra.mxu0 0.0
      %1350 = vmatprep.subr.mxu0 0.0
      %1351 = vmatpush1.msra.mxu0 0.0
      %1352 = vmatprep.subr.mxu0 0.0
      %1353 = vmatpush1.msra.mxu0 0.0
      %1354 = vmatprep.subr.mxu0 0.0
      %1355 = vmatpush1.msra.mxu0 0.0
      %1356 = vmatprep.mubr.f32.mxu0 0.0
      %1357 = vmatmul.mubr.f32.gmra.mrb[0].mxu0 %v1290
      %v1358 = vpop.f32.mrb[0].mxu0
      %v1359 = vadd.f32 0.0, %v1358
      %v1360 = vpop.f32.mrb[0].mxu0
      %v1361 = vadd.f32 0.0, %v1360
      %1362 = vdwg.mxu0
      %v1364 = vsel %vm1288, %v1277, 0
      %1366 = vmatprep.subr.mxu0 %v1276
      %1367 = vmatpush1.msra.mxu0 %v1275
      %1368 = vmatprep.subr.mxu0 0.0
      %1369 = vmatpush1.msra.mxu0 0.0
      %1370 = vmatprep.subr.mxu0 0.0
      %1371 = vmatpush1.msra.mxu0 0.0
      %1372 = vmatprep.subr.mxu0 0.0
      %1373 = vmatpush1.msra.mxu0 0.0
      %1374 = vmatprep.subr.mxu0 0.0
      %1375 = vmatpush1.msra.mxu0 0.0
      %1376 = vmatprep.subr.mxu0 0.0
      %1377 = vmatpush1.msra.mxu0 0.0
      %1378 = vmatprep.subr.mxu0 0.0
      %1379 = vmatpush1.msra.mxu0 0.0
      %1380 = vmatprep.subr.mxu0 0.0
      %1381 = vmatpush1.msra.mxu0 0.0
      %1382 = vmatprep.subr.mxu0 0.0
      %1383 = vmatpush1.msra.mxu0 0.0
      %1384 = vmatprep.subr.mxu0 0.0
      %1385 = vmatpush1.msra.mxu0 0.0
      %1386 = vmatprep.subr.mxu0 0.0
      %1387 = vmatpush1.msra.mxu0 0.0
      %1388 = vmatprep.subr.mxu0 0.0
      %1389 = vmatpush1.msra.mxu0 0.0
      %1390 = vmatprep.subr.mxu0 0.0
      %1391 = vmatpush1.msra.mxu0 0.0
      %1392 = vmatprep.subr.mxu0 0.0
      %1393 = vmatpush1.msra.mxu0 0.0
      %1394 = vmatprep.subr.mxu0 0.0
      %1395 = vmatpush1.msra.mxu0 0.0
      %1396 = vmatprep.subr.mxu0 0.0
      %1397 = vmatpush1.msra.mxu0 0.0
      %1398 = vmatprep.subr.mxu0 0.0
      %1399 = vmatpush1.msra.mxu0 0.0
      %1400 = vmatprep.subr.mxu0 0.0
      %1401 = vmatpush1.msra.mxu0 0.0
      %1402 = vmatprep.subr.mxu0 0.0
      %1403 = vmatpush1.msra.mxu0 0.0
      %1404 = vmatprep.subr.mxu0 0.0
      %1405 = vmatpush1.msra.mxu0 0.0
      %1406 = vmatprep.subr.mxu0 0.0
      %1407 = vmatpush1.msra.mxu0 0.0
      %1408 = vmatprep.subr.mxu0 0.0
      %1409 = vmatpush1.msra.mxu0 0.0
      %1410 = vmatprep.subr.mxu0 0.0
      %1411 = vmatpush1.msra.mxu0 0.0
      %1412 = vmatprep.subr.mxu0 0.0
      %1413 = vmatpush1.msra.mxu0 0.0
      %1414 = vmatprep.subr.mxu0 0.0
      %1415 = vmatpush1.msra.mxu0 0.0
      %1416 = vmatprep.subr.mxu0 0.0
      %1417 = vmatpush1.msra.mxu0 0.0
      %1418 = vmatprep.subr.mxu0 0.0
      %1419 = vmatpush1.msra.mxu0 0.0
      %1420 = vmatprep.subr.mxu0 0.0
      %1421 = vmatpush1.msra.mxu0 0.0
      %1422 = vmatprep.subr.mxu0 0.0
      %1423 = vmatpush1.msra.mxu0 0.0
      %1424 = vmatprep.subr.mxu0 0.0
      %1425 = vmatpush1.msra.mxu0 0.0
      %1426 = vmatprep.subr.mxu0 0.0
      %1427 = vmatpush1.msra.mxu0 0.0
      %1428 = vmatprep.subr.mxu0 0.0
      %1429 = vmatpush1.msra.mxu0 0.0
      %1430 = vmatprep.mubr.f32.mxu0 0.0
      %1431 = vmatmul.mubr.f32.gmra.mrb[0].mxu0 %v1364
      %v1432 = vpop.f32.mrb[0].mxu0
      %v1433 = vadd.f32 %v1359, %v1432
      %v1434 = vpop.f32.mrb[0].mxu0
      %v1435 = vadd.f32 %v1361, %v1434
      %1436 = vdwg.mxu0
      %1437 = vrot.lane.b32.xlu0 %v1266, 15
      %v1438 = vpop.permute.xlu0 %1437
      %1439 = vrot.lane.b32.xlu0 %v1267, 15
      %v1440 = vpop.permute.xlu0 %1439
      %v1441 = vsel %vm563, %v1438, %v1440
      %v1442 = vsel %vm563, %v1440, %v1438
      %v1443 = vmul.f32 %v1442, %v569
      %v1444 = vmul.f32 %v1441, %v573
      %s1445 = scalar_lea.vmem %s6, 16
      %v1446 = vld [vmem:[%s1445] sm:$0xff]
      %v1448 = vsel %vm1288, %v1446, 0
      %1450 = vmatprep.subr.mxu0 %v1444
      %1451 = vmatpush1.msra.mxu0 %v1443
      %1452 = vmatprep.subr.mxu0 0.0
      %1453 = vmatpush1.msra.mxu0 0.0
      %1454 = vmatprep.subr.mxu0 0.0
      %1455 = vmatpush1.msra.mxu0 0.0
      %1456 = vmatprep.subr.mxu0 0.0
      %1457 = vmatpush1.msra.mxu0 0.0
      %1458 = vmatprep.subr.mxu0 0.0
      %1459 = vmatpush1.msra.mxu0 0.0
      %1460 = vmatprep.subr.mxu0 0.0
      %1461 = vmatpush1.msra.mxu0 0.0
      %1462 = vmatprep.subr.mxu0 0.0
      %1463 = vmatpush1.msra.mxu0 0.0
      %1464 = vmatprep.subr.mxu0 0.0
      %1465 = vmatpush1.msra.mxu0 0.0
      %1466 = vmatprep.subr.mxu0 0.0
      %1467 = vmatpush1.msra.mxu0 0.0
      %1468 = vmatprep.subr.mxu0 0.0
      %1469 = vmatpush1.msra.mxu0 0.0
      %1470 = vmatprep.subr.mxu0 0.0
      %1471 = vmatpush1.msra.mxu0 0.0
      %1472 = vmatprep.subr.mxu0 0.0
      %1473 = vmatpush1.msra.mxu0 0.0
      %1474 = vmatprep.subr.mxu0 0.0
      %1475 = vmatpush1.msra.mxu0 0.0
      %1476 = vmatprep.subr.mxu0 0.0
      %1477 = vmatpush1.msra.mxu0 0.0
      %1478 = vmatprep.subr.mxu0 0.0
      %1479 = vmatpush1.msra.mxu0 0.0
      %1480 = vmatprep.subr.mxu0 0.0
      %1481 = vmatpush1.msra.mxu0 0.0
      %1482 = vmatprep.subr.mxu0 0.0
      %1483 = vmatpush1.msra.mxu0 0.0
      %1484 = vmatprep.subr.mxu0 0.0
      %1485 = vmatpush1.msra.mxu0 0.0
      %1486 = vmatprep.subr.mxu0 0.0
      %1487 = vmatpush1.msra.mxu0 0.0
      %1488 = vmatprep.subr.mxu0 0.0
      %1489 = vmatpush1.msra.mxu0 0.0
      %1490 = vmatprep.subr.mxu0 0.0
      %1491 = vmatpush1.msra.mxu0 0.0
      %1492 = vmatprep.subr.mxu0 0.0
      %1493 = vmatpush1.msra.mxu0 0.0
      %1494 = vmatprep.subr.mxu0 0.0
      %1495 = vmatpush1.msra.mxu0 0.0
      %1496 = vmatprep.subr.mxu0 0.0
      %1497 = vmatpush1.msra.mxu0 0.0
      %1498 = vmatprep.subr.mxu0 0.0
      %1499 = vmatpush1.msra.mxu0 0.0
      %1500 = vmatprep.subr.mxu0 0.0
      %1501 = vmatpush1.msra.mxu0 0.0
      %1502 = vmatprep.subr.mxu0 0.0
      %1503 = vmatpush1.msra.mxu0 0.0
      %1504 = vmatprep.subr.mxu0 0.0
      %1505 = vmatpush1.msra.mxu0 0.0
      %1506 = vmatprep.subr.mxu0 0.0
      %1507 = vmatpush1.msra.mxu0 0.0
      %1508 = vmatprep.subr.mxu0 0.0
      %1509 = vmatpush1.msra.mxu0 0.0
      %1510 = vmatprep.subr.mxu0 0.0
      %1511 = vmatpush1.msra.mxu0 0.0
      %1512 = vmatprep.subr.mxu0 0.0
      %1513 = vmatpush1.msra.mxu0 0.0
      %1514 = vmatprep.mubr.f32.mxu0 0.0
      %1515 = vmatmul.mubr.f32.gmra.mrb[0].mxu0 %v1448
      %v1516 = vpop.f32.mrb[0].mxu0
      %v1517 = vadd.f32 0.0, %v1516
      %v1518 = vpop.f32.mrb[0].mxu0
      %v1519 = vadd.f32 0.0, %v1518
      %1520 = vdwg.mxu0
      %v1521 = vadd.f32 %v1433, %v1517
      %v1522 = vadd.f32 %v1435, %v1519
      %1523 = vrot.lane.b32.xlu0 %v1266, 1
      %v1524 = vpop.permute.xlu0 %1523
      %1525 = vrot.lane.b32.xlu0 %v1267, 1
      %v1526 = vpop.permute.xlu0 %1525
      %v1527 = vsel %vm664, %v1524, %v1526
      %v1528 = vsel %vm664, %v1526, %v1524
      %v1529 = vmul.f32 %v1528, %v670
      %v1530 = vmul.f32 %v1527, %v674
      %s1531 = scalar_lea.vmem %s6, 24
      %v1532 = vld [vmem:[%s1531] sm:$0xff]
      %v1534 = vsel %vm1288, %v1532, 0
      %1536 = vmatprep.subr.mxu0 %v1530
      %1537 = vmatpush1.msra.mxu0 %v1529
      %1538 = vmatprep.subr.mxu0 0.0
      %1539 = vmatpush1.msra.mxu0 0.0
      %1540 = vmatprep.subr.mxu0 0.0
      %1541 = vmatpush1.msra.mxu0 0.0
      %1542 = vmatprep.subr.mxu0 0.0
      %1543 = vmatpush1.msra.mxu0 0.0
      %1544 = vmatprep.subr.mxu0 0.0
      %1545 = vmatpush1.msra.mxu0 0.0
      %1546 = vmatprep.subr.mxu0 0.0
      %1547 = vmatpush1.msra.mxu0 0.0
      %1548 = vmatprep.subr.mxu0 0.0
      %1549 = vmatpush1.msra.mxu0 0.0
      %1550 = vmatprep.subr.mxu0 0.0
      %1551 = vmatpush1.msra.mxu0 0.0
      %1552 = vmatprep.subr.mxu0 0.0
      %1553 = vmatpush1.msra.mxu0 0.0
      %1554 = vmatprep.subr.mxu0 0.0
      %1555 = vmatpush1.msra.mxu0 0.0
      %1556 = vmatprep.subr.mxu0 0.0
      %1557 = vmatpush1.msra.mxu0 0.0
      %1558 = vmatprep.subr.mxu0 0.0
      %1559 = vmatpush1.msra.mxu0 0.0
      %1560 = vmatprep.subr.mxu0 0.0
      %1561 = vmatpush1.msra.mxu0 0.0
      %1562 = vmatprep.subr.mxu0 0.0
      %1563 = vmatpush1.msra.mxu0 0.0
      %1564 = vmatprep.subr.mxu0 0.0
      %1565 = vmatpush1.msra.mxu0 0.0
      %1566 = vmatprep.subr.mxu0 0.0
      %1567 = vmatpush1.msra.mxu0 0.0
      %1568 = vmatprep.subr.mxu0 0.0
      %1569 = vmatpush1.msra.mxu0 0.0
      %1570 = vmatprep.subr.mxu0 0.0
      %1571 = vmatpush1.msra.mxu0 0.0
      %1572 = vmatprep.subr.mxu0 0.0
      %1573 = vmatpush1.msra.mxu0 0.0
      %1574 = vmatprep.subr.mxu0 0.0
      %1575 = vmatpush1.msra.mxu0 0.0
      %1576 = vmatprep.subr.mxu0 0.0
      %1577 = vmatpush1.msra.mxu0 0.0
      %1578 = vmatprep.subr.mxu0 0.0
      %1579 = vmatpush1.msra.mxu0 0.0
      %1580 = vmatprep.subr.mxu0 0.0
      %1581 = vmatpush1.msra.mxu0 0.0
      %1582 = vmatprep.subr.mxu0 0.0
      %1583 = vmatpush1.msra.mxu0 0.0
      %1584 = vmatprep.subr.mxu0 0.0
      %1585 = vmatpush1.msra.mxu0 0.0
      %1586 = vmatprep.subr.mxu0 0.0
      %1587 = vmatpush1.msra.mxu0 0.0
      %1588 = vmatprep.subr.mxu0 0.0
      %1589 = vmatpush1.msra.mxu0 0.0
      %1590 = vmatprep.subr.mxu0 0.0
      %1591 = vmatpush1.msra.mxu0 0.0
      %1592 = vmatprep.subr.mxu0 0.0
      %1593 = vmatpush1.msra.mxu0 0.0
      %1594 = vmatprep.subr.mxu0 0.0
      %1595 = vmatpush1.msra.mxu0 0.0
      %1596 = vmatprep.subr.mxu0 0.0
      %1597 = vmatpush1.msra.mxu0 0.0
      %1598 = vmatprep.subr.mxu0 0.0
      %1599 = vmatpush1.msra.mxu0 0.0
      %1600 = vmatprep.mubr.f32.mxu0 0.0
      %1601 = vmatmul.mubr.f32.gmra.mrb[0].mxu0 %v1534
      %v1602 = vpop.f32.mrb[0].mxu0
      %v1603 = vadd.f32 0.0, %v1602
      %v1604 = vpop.f32.mrb[0].mxu0
      %v1605 = vadd.f32 0.0, %v1604
      %1606 = vdwg.mxu0
      %v1607 = vadd.f32 %v1521, %v1603
      %v1608 = vadd.f32 %v1522, %v1605
      %s1609 = scalar_lea.vmem %s6, 32
      %v1610 = vld [vmem:[%s1609] sm:$0xff]
      %v1612 = vsel %vm1288, %v1610, 0
      %1614 = vmatprep.subr.mxu0 %v1267
      %1615 = vmatpush1.msra.mxu0 %v1266
      %1616 = vmatprep.subr.mxu0 0.0
      %1617 = vmatpush1.msra.mxu0 0.0
      %1618 = vmatprep.subr.mxu0 0.0
      %1619 = vmatpush1.msra.mxu0 0.0
      %1620 = vmatprep.subr.mxu0 0.0
      %1621 = vmatpush1.msra.mxu0 0.0
      %1622 = vmatprep.subr.mxu0 0.0
      %1623 = vmatpush1.msra.mxu0 0.0
      %1624 = vmatprep.subr.mxu0 0.0
      %1625 = vmatpush1.msra.mxu0 0.0
      %1626 = vmatprep.subr.mxu0 0.0
      %1627 = vmatpush1.msra.mxu0 0.0
      %1628 = vmatprep.subr.mxu0 0.0
      %1629 = vmatpush1.msra.mxu0 0.0
      %1630 = vmatprep.subr.mxu0 0.0
      %1631 = vmatpush1.msra.mxu0 0.0
      %1632 = vmatprep.subr.mxu0 0.0
      %1633 = vmatpush1.msra.mxu0 0.0
      %1634 = vmatprep.subr.mxu0 0.0
      %1635 = vmatpush1.msra.mxu0 0.0
      %1636 = vmatprep.subr.mxu0 0.0
      %1637 = vmatpush1.msra.mxu0 0.0
      %1638 = vmatprep.subr.mxu0 0.0
      %1639 = vmatpush1.msra.mxu0 0.0
      %1640 = vmatprep.subr.mxu0 0.0
      %1641 = vmatpush1.msra.mxu0 0.0
      %1642 = vmatprep.subr.mxu0 0.0
      %1643 = vmatpush1.msra.mxu0 0.0
      %1644 = vmatprep.subr.mxu0 0.0
      %1645 = vmatpush1.msra.mxu0 0.0
      %1646 = vmatprep.subr.mxu0 0.0
      %1647 = vmatpush1.msra.mxu0 0.0
      %1648 = vmatprep.subr.mxu0 0.0
      %1649 = vmatpush1.msra.mxu0 0.0
      %1650 = vmatprep.subr.mxu0 0.0
      %1651 = vmatpush1.msra.mxu0 0.0
      %1652 = vmatprep.subr.mxu0 0.0
      %1653 = vmatpush1.msra.mxu0 0.0
      %1654 = vmatprep.subr.mxu0 0.0
      %1655 = vmatpush1.msra.mxu0 0.0
      %1656 = vmatprep.subr.mxu0 0.0
      %1657 = vmatpush1.msra.mxu0 0.0
      %1658 = vmatprep.subr.mxu0 0.0
      %1659 = vmatpush1.msra.mxu0 0.0
      %1660 = vmatprep.subr.mxu0 0.0
      %1661 = vmatpush1.msra.mxu0 0.0
      %1662 = vmatprep.subr.mxu0 0.0
      %1663 = vmatpush1.msra.mxu0 0.0
      %1664 = vmatprep.subr.mxu0 0.0
      %1665 = vmatpush1.msra.mxu0 0.0
      %1666 = vmatprep.subr.mxu0 0.0
      %1667 = vmatpush1.msra.mxu0 0.0
      %1668 = vmatprep.subr.mxu0 0.0
      %1669 = vmatpush1.msra.mxu0 0.0
      %1670 = vmatprep.subr.mxu0 0.0
      %1671 = vmatpush1.msra.mxu0 0.0
      %1672 = vmatprep.subr.mxu0 0.0
      %1673 = vmatpush1.msra.mxu0 0.0
      %1674 = vmatprep.subr.mxu0 0.0
      %1675 = vmatpush1.msra.mxu0 0.0
      %1676 = vmatprep.subr.mxu0 0.0
      %1677 = vmatpush1.msra.mxu0 0.0
      %1678 = vmatprep.mubr.f32.mxu0 0.0
      %1679 = vmatmul.mubr.f32.gmra.mrb[0].mxu0 %v1612
      %v1680 = vpop.f32.mrb[0].mxu0
      %v1681 = vadd.f32 0.0, %v1680
      %v1682 = vpop.f32.mrb[0].mxu0
      %v1683 = vadd.f32 0.0, %v1682
      %1684 = vdwg.mxu0
      %v1685 = vadd.f32 %v1607, %v1681
      %v1686 = vadd.f32 %v1608, %v1683
      %1687 = vrot.lane.b32.xlu0 %v1266, 127
      %v1688 = vpop.permute.xlu0 %1687
      %1689 = vrot.lane.b32.xlu0 %v1267, 127
      %v1690 = vpop.permute.xlu0 %1689
      %v1691 = vsel %vm847, %v1688, %v1690
      %v1692 = vsel %vm847, %v1690, %v1688
      %v1693 = vmul.f32 %v1691, %v853
      %v1694 = vmul.f32 %v1692, %v857
      %s1695 = scalar_lea.vmem %s6, 40
      %v1696 = vld [vmem:[%s1695] sm:$0xff]
      %v1698 = vsel %vm1288, %v1696, 0
      %1700 = vmatprep.subr.mxu0 %v1694
      %1701 = vmatpush1.msra.mxu0 %v1693
      %1702 = vmatprep.subr.mxu0 0.0
      %1703 = vmatpush1.msra.mxu0 0.0
      %1704 = vmatprep.subr.mxu0 0.0
      %1705 = vmatpush1.msra.mxu0 0.0
      %1706 = vmatprep.subr.mxu0 0.0
      %1707 = vmatpush1.msra.mxu0 0.0
      %1708 = vmatprep.subr.mxu0 0.0
      %1709 = vmatpush1.msra.mxu0 0.0
      %1710 = vmatprep.subr.mxu0 0.0
      %1711 = vmatpush1.msra.mxu0 0.0
      %1712 = vmatprep.subr.mxu0 0.0
      %1713 = vmatpush1.msra.mxu0 0.0
      %1714 = vmatprep.subr.mxu0 0.0
      %1715 = vmatpush1.msra.mxu0 0.0
      %1716 = vmatprep.subr.mxu0 0.0
      %1717 = vmatpush1.msra.mxu0 0.0
      %1718 = vmatprep.subr.mxu0 0.0
      %1719 = vmatpush1.msra.mxu0 0.0
      %1720 = vmatprep.subr.mxu0 0.0
      %1721 = vmatpush1.msra.mxu0 0.0
      %1722 = vmatprep.subr.mxu0 0.0
      %1723 = vmatpush1.msra.mxu0 0.0
      %1724 = vmatprep.subr.mxu0 0.0
      %1725 = vmatpush1.msra.mxu0 0.0
      %1726 = vmatprep.subr.mxu0 0.0
      %1727 = vmatpush1.msra.mxu0 0.0
      %1728 = vmatprep.subr.mxu0 0.0
      %1729 = vmatpush1.msra.mxu0 0.0
      %1730 = vmatprep.subr.mxu0 0.0
      %1731 = vmatpush1.msra.mxu0 0.0
      %1732 = vmatprep.subr.mxu0 0.0
      %1733 = vmatpush1.msra.mxu0 0.0
      %1734 = vmatprep.subr.mxu0 0.0
      %1735 = vmatpush1.msra.mxu0 0.0
      %1736 = vmatprep.subr.mxu0 0.0
      %1737 = vmatpush1.msra.mxu0 0.0
      %1738 = vmatprep.subr.mxu0 0.0
      %1739 = vmatpush1.msra.mxu0 0.0
      %1740 = vmatprep.subr.mxu0 0.0
      %1741 = vmatpush1.msra.mxu0 0.0
      %1742 = vmatprep.subr.mxu0 0.0
      %1743 = vmatpush1.msra.mxu0 0.0
      %1744 = vmatprep.subr.mxu0 0.0
      %1745 = vmatpush1.msra.mxu0 0.0
      %1746 = vmatprep.subr.mxu0 0.0
      %1747 = vmatpush1.msra.mxu0 0.0
      %1748 = vmatprep.subr.mxu0 0.0
      %1749 = vmatpush1.msra.mxu0 0.0
      %1750 = vmatprep.subr.mxu0 0.0
      %1751 = vmatpush1.msra.mxu0 0.0
      %1752 = vmatprep.subr.mxu0 0.0
      %1753 = vmatpush1.msra.mxu0 0.0
      %1754 = vmatprep.subr.mxu0 0.0
      %1755 = vmatpush1.msra.mxu0 0.0
      %1756 = vmatprep.subr.mxu0 0.0
      %1757 = vmatpush1.msra.mxu0 0.0
      %1758 = vmatprep.subr.mxu0 0.0
      %1759 = vmatpush1.msra.mxu0 0.0
      %1760 = vmatprep.subr.mxu0 0.0
      %1761 = vmatpush1.msra.mxu0 0.0
      %1762 = vmatprep.subr.mxu0 0.0
      %1763 = vmatpush1.msra.mxu0 0.0
      %1764 = vmatprep.mubr.f32.mxu0 0.0
      %1765 = vmatmul.mubr.f32.gmra.mrb[0].mxu0 %v1698
      %v1766 = vpop.f32.mrb[0].mxu0
      %v1767 = vadd.f32 0.0, %v1766
      %v1768 = vpop.f32.mrb[0].mxu0
      %v1769 = vadd.f32 0.0, %v1768
      %1770 = vdwg.mxu0
      %v1771 = vadd.f32 %v1685, %v1767
      %v1772 = vadd.f32 %v1686, %v1769
      %1773 = vrot.lane.b32.xlu0 %v1266, 113
      %v1774 = vpop.permute.xlu0 %1773
      %1775 = vrot.lane.b32.xlu0 %v1267, 113
      %v1776 = vpop.permute.xlu0 %1775
      %v1777 = vsel %vm948, %v1774, %v1776
      %v1778 = vsel %vm948, %v1776, %v1774
      %v1779 = vmul.f32 %v1777, %v954
      %v1780 = vmul.f32 %v1778, %v958
      %s1781 = scalar_lea.vmem %s6, 48
      %v1782 = vld [vmem:[%s1781] sm:$0xff]
      %v1784 = vsel %vm1288, %v1782, 0
      %1786 = vmatprep.subr.mxu0 %v1780
      %1787 = vmatpush1.msra.mxu0 %v1779
      %1788 = vmatprep.subr.mxu0 0.0
      %1789 = vmatpush1.msra.mxu0 0.0
      %1790 = vmatprep.subr.mxu0 0.0
      %1791 = vmatpush1.msra.mxu0 0.0
      %1792 = vmatprep.subr.mxu0 0.0
      %1793 = vmatpush1.msra.mxu0 0.0
      %1794 = vmatprep.subr.mxu0 0.0
      %1795 = vmatpush1.msra.mxu0 0.0
      %1796 = vmatprep.subr.mxu0 0.0
      %1797 = vmatpush1.msra.mxu0 0.0
      %1798 = vmatprep.subr.mxu0 0.0
      %1799 = vmatpush1.msra.mxu0 0.0
      %1800 = vmatprep.subr.mxu0 0.0
      %1801 = vmatpush1.msra.mxu0 0.0
      %1802 = vmatprep.subr.mxu0 0.0
      %1803 = vmatpush1.msra.mxu0 0.0
      %1804 = vmatprep.subr.mxu0 0.0
      %1805 = vmatpush1.msra.mxu0 0.0
      %1806 = vmatprep.subr.mxu0 0.0
      %1807 = vmatpush1.msra.mxu0 0.0
      %1808 = vmatprep.subr.mxu0 0.0
      %1809 = vmatpush1.msra.mxu0 0.0
      %1810 = vmatprep.subr.mxu0 0.0
      %1811 = vmatpush1.msra.mxu0 0.0
      %1812 = vmatprep.subr.mxu0 0.0
      %1813 = vmatpush1.msra.mxu0 0.0
      %1814 = vmatprep.subr.mxu0 0.0
      %1815 = vmatpush1.msra.mxu0 0.0
      %1816 = vmatprep.subr.mxu0 0.0
      %1817 = vmatpush1.msra.mxu0 0.0
      %1818 = vmatprep.subr.mxu0 0.0
      %1819 = vmatpush1.msra.mxu0 0.0
      %1820 = vmatprep.subr.mxu0 0.0
      %1821 = vmatpush1.msra.mxu0 0.0
      %1822 = vmatprep.subr.mxu0 0.0
      %1823 = vmatpush1.msra.mxu0 0.0
      %1824 = vmatprep.subr.mxu0 0.0
      %1825 = vmatpush1.msra.mxu0 0.0
      %1826 = vmatprep.subr.mxu0 0.0
      %1827 = vmatpush1.msra.mxu0 0.0
      %1828 = vmatprep.subr.mxu0 0.0
      %1829 = vmatpush1.msra.mxu0 0.0
      %1830 = vmatprep.subr.mxu0 0.0
      %1831 = vmatpush1.msra.mxu0 0.0
      %1832 = vmatprep.subr.mxu0 0.0
      %1833 = vmatpush1.msra.mxu0 0.0
      %1834 = vmatprep.subr.mxu0 0.0
      %1835 = vmatpush1.msra.mxu0 0.0
      %1836 = vmatprep.subr.mxu0 0.0
      %1837 = vmatpush1.msra.mxu0 0.0
      %1838 = vmatprep.subr.mxu0 0.0
      %1839 = vmatpush1.msra.mxu0 0.0
      %1840 = vmatprep.subr.mxu0 0.0
      %1841 = vmatpush1.msra.mxu0 0.0
      %1842 = vmatprep.subr.mxu0 0.0
      %1843 = vmatpush1.msra.mxu0 0.0
      %1844 = vmatprep.subr.mxu0 0.0
      %1845 = vmatpush1.msra.mxu0 0.0
      %1846 = vmatprep.subr.mxu0 0.0
      %1847 = vmatpush1.msra.mxu0 0.0
      %1848 = vmatprep.subr.mxu0 0.0
      %1849 = vmatpush1.msra.mxu0 0.0
      %1850 = vmatprep.mubr.f32.mxu0 0.0
      %1851 = vmatmul.mubr.f32.gmra.mrb[0].mxu0 %v1784
      %v1852 = vpop.f32.mrb[0].mxu0
      %v1853 = vadd.f32 0.0, %v1852
      %v1854 = vpop.f32.mrb[0].mxu0
      %v1855 = vadd.f32 0.0, %v1854
      %1856 = vdwg.mxu0
      %v1857 = vadd.f32 %v1771, %v1853
      %v1858 = vadd.f32 %v1772, %v1855
      %1859 = vrot.lane.b32.xlu0 %v1266, 112
      %v1860 = vpop.permute.xlu0 %1859
      %1861 = vrot.lane.b32.xlu0 %v1267, 112
      %v1862 = vpop.permute.xlu0 %1861
      %v1863 = vsel %vm1049, %v1860, %v1862
      %v1864 = vsel %vm1049, %v1862, %v1860
      %v1865 = vmul.f32 %v1863, %v1055
      %v1866 = vmul.f32 %v1864, %v1059
      %s1867 = scalar_lea.vmem %s6, 56
      %v1868 = vld [vmem:[%s1867] sm:$0xff]
      %v1870 = vsel %vm1288, %v1868, 0
      %1872 = vmatprep.subr.mxu0 %v1866
      %1873 = vmatpush1.msra.mxu0 %v1865
      %1874 = vmatprep.subr.mxu0 0.0
      %1875 = vmatpush1.msra.mxu0 0.0
      %1876 = vmatprep.subr.mxu0 0.0
      %1877 = vmatpush1.msra.mxu0 0.0
      %1878 = vmatprep.subr.mxu0 0.0
      %1879 = vmatpush1.msra.mxu0 0.0
      %1880 = vmatprep.subr.mxu0 0.0
      %1881 = vmatpush1.msra.mxu0 0.0
      %1882 = vmatprep.subr.mxu0 0.0
      %1883 = vmatpush1.msra.mxu0 0.0
      %1884 = vmatprep.subr.mxu0 0.0
      %1885 = vmatpush1.msra.mxu0 0.0
      %1886 = vmatprep.subr.mxu0 0.0
      %1887 = vmatpush1.msra.mxu0 0.0
      %1888 = vmatprep.subr.mxu0 0.0
      %1889 = vmatpush1.msra.mxu0 0.0
      %1890 = vmatprep.subr.mxu0 0.0
      %1891 = vmatpush1.msra.mxu0 0.0
      %1892 = vmatprep.subr.mxu0 0.0
      %1893 = vmatpush1.msra.mxu0 0.0
      %1894 = vmatprep.subr.mxu0 0.0
      %1895 = vmatpush1.msra.mxu0 0.0
      %1896 = vmatprep.subr.mxu0 0.0
      %1897 = vmatpush1.msra.mxu0 0.0
      %1898 = vmatprep.subr.mxu0 0.0
      %1899 = vmatpush1.msra.mxu0 0.0
      %1900 = vmatprep.subr.mxu0 0.0
      %1901 = vmatpush1.msra.mxu0 0.0
      %1902 = vmatprep.subr.mxu0 0.0
      %1903 = vmatpush1.msra.mxu0 0.0
      %1904 = vmatprep.subr.mxu0 0.0
      %1905 = vmatpush1.msra.mxu0 0.0
      %1906 = vmatprep.subr.mxu0 0.0
      %1907 = vmatpush1.msra.mxu0 0.0
      %1908 = vmatprep.subr.mxu0 0.0
      %1909 = vmatpush1.msra.mxu0 0.0
      %1910 = vmatprep.subr.mxu0 0.0
      %1911 = vmatpush1.msra.mxu0 0.0
      %1912 = vmatprep.subr.mxu0 0.0
      %1913 = vmatpush1.msra.mxu0 0.0
      %1914 = vmatprep.subr.mxu0 0.0
      %1915 = vmatpush1.msra.mxu0 0.0
      %1916 = vmatprep.subr.mxu0 0.0
      %1917 = vmatpush1.msra.mxu0 0.0
      %1918 = vmatprep.subr.mxu0 0.0
      %1919 = vmatpush1.msra.mxu0 0.0
      %1920 = vmatprep.subr.mxu0 0.0
      %1921 = vmatpush1.msra.mxu0 0.0
      %1922 = vmatprep.subr.mxu0 0.0
      %1923 = vmatpush1.msra.mxu0 0.0
      %1924 = vmatprep.subr.mxu0 0.0
      %1925 = vmatpush1.msra.mxu0 0.0
      %1926 = vmatprep.subr.mxu0 0.0
      %1927 = vmatpush1.msra.mxu0 0.0
      %1928 = vmatprep.subr.mxu0 0.0
      %1929 = vmatpush1.msra.mxu0 0.0
      %1930 = vmatprep.subr.mxu0 0.0
      %1931 = vmatpush1.msra.mxu0 0.0
      %1932 = vmatprep.subr.mxu0 0.0
      %1933 = vmatpush1.msra.mxu0 0.0
      %1934 = vmatprep.subr.mxu0 0.0
      %1935 = vmatpush1.msra.mxu0 0.0
      %1936 = vmatprep.mubr.f32.mxu0 0.0
      %1937 = vmatmul.mubr.f32.gmra.mrb[0].mxu0 %v1870
      %v1938 = vpop.f32.mrb[0].mxu0
      %v1939 = vadd.f32 0.0, %v1938
      %v1940 = vpop.f32.mrb[0].mxu0
      %v1941 = vadd.f32 0.0, %v1940
      %1942 = vdwg.mxu0
      %v1943 = vadd.f32 %v1857, %v1939
      %v1944 = vadd.f32 %v1858, %v1941
      %1945 = vrot.lane.b32.xlu0 %v1266, 111
      %v1946 = vpop.permute.xlu0 %1945
      %1947 = vrot.lane.b32.xlu0 %v1267, 111
      %v1948 = vpop.permute.xlu0 %1947
      %v1949 = vsel %vm1150, %v1946, %v1948
      %v1950 = vsel %vm1150, %v1948, %v1946
      %v1951 = vmul.f32 %v1949, %v1156
      %v1952 = vmul.f32 %v1950, %v1160
      %s1953 = scalar_lea.vmem %s6, 64
      %v1954 = vld [vmem:[%s1953] sm:$0xff]
      %v1956 = vsel %vm1288, %v1954, 0
      %1958 = vmatprep.subr.mxu0 %v1952
      %1959 = vmatpush1.msra.mxu0 %v1951
      %1960 = vmatprep.subr.mxu0 0.0
      %1961 = vmatpush1.msra.mxu0 0.0
      %1962 = vmatprep.subr.mxu0 0.0
      %1963 = vmatpush1.msra.mxu0 0.0
      %1964 = vmatprep.subr.mxu0 0.0
      %1965 = vmatpush1.msra.mxu0 0.0
      %1966 = vmatprep.subr.mxu0 0.0
      %1967 = vmatpush1.msra.mxu0 0.0
      %1968 = vmatprep.subr.mxu0 0.0
      %1969 = vmatpush1.msra.mxu0 0.0
      %1970 = vmatprep.subr.mxu0 0.0
      %1971 = vmatpush1.msra.mxu0 0.0
      %1972 = vmatprep.subr.mxu0 0.0
      %1973 = vmatpush1.msra.mxu0 0.0
      %1974 = vmatprep.subr.mxu0 0.0
      %1975 = vmatpush1.msra.mxu0 0.0
      %1976 = vmatprep.subr.mxu0 0.0
      %1977 = vmatpush1.msra.mxu0 0.0
      %1978 = vmatprep.subr.mxu0 0.0
      %1979 = vmatpush1.msra.mxu0 0.0
      %1980 = vmatprep.subr.mxu0 0.0
      %1981 = vmatpush1.msra.mxu0 0.0
      %1982 = vmatprep.subr.mxu0 0.0
      %1983 = vmatpush1.msra.mxu0 0.0
      %1984 = vmatprep.subr.mxu0 0.0
      %1985 = vmatpush1.msra.mxu0 0.0
      %1986 = vmatprep.subr.mxu0 0.0
      %1987 = vmatpush1.msra.mxu0 0.0
      %1988 = vmatprep.subr.mxu0 0.0
      %1989 = vmatpush1.msra.mxu0 0.0
      %1990 = vmatprep.subr.mxu0 0.0
      %1991 = vmatpush1.msra.mxu0 0.0
      %1992 = vmatprep.subr.mxu0 0.0
      %1993 = vmatpush1.msra.mxu0 0.0
      %1994 = vmatprep.subr.mxu0 0.0
      %1995 = vmatpush1.msra.mxu0 0.0
      %1996 = vmatprep.subr.mxu0 0.0
      %1997 = vmatpush1.msra.mxu0 0.0
      %1998 = vmatprep.subr.mxu0 0.0
      %1999 = vmatpush1.msra.mxu0 0.0
      %2000 = vmatprep.subr.mxu0 0.0
      %2001 = vmatpush1.msra.mxu0 0.0
      %2002 = vmatprep.subr.mxu0 0.0
      %2003 = vmatpush1.msra.mxu0 0.0
      %2004 = vmatprep.subr.mxu0 0.0
      %2005 = vmatpush1.msra.mxu0 0.0
      %2006 = vmatprep.subr.mxu0 0.0
      %2007 = vmatpush1.msra.mxu0 0.0
      %2008 = vmatprep.subr.mxu0 0.0
      %2009 = vmatpush1.msra.mxu0 0.0
      %2010 = vmatprep.subr.mxu0 0.0
      %2011 = vmatpush1.msra.mxu0 0.0
      %2012 = vmatprep.subr.mxu0 0.0
      %2013 = vmatpush1.msra.mxu0 0.0
      %2014 = vmatprep.subr.mxu0 0.0
      %2015 = vmatpush1.msra.mxu0 0.0
      %2016 = vmatprep.subr.mxu0 0.0
      %2017 = vmatpush1.msra.mxu0 0.0
      %2018 = vmatprep.subr.mxu0 0.0
      %2019 = vmatpush1.msra.mxu0 0.0
      %2020 = vmatprep.subr.mxu0 0.0
      %2021 = vmatpush1.msra.mxu0 0.0
      %2022 = vmatprep.mubr.f32.mxu0 0.0
      %2023 = vmatmul.mubr.f32.gmra.mrb[0].mxu0 %v1956
      %v2024 = vpop.f32.mrb[0].mxu0
      %v2025 = vadd.f32 0.0, %v2024
      %v2026 = vpop.f32.mrb[0].mxu0
      %v2027 = vadd.f32 0.0, %v2026
      %2028 = vdwg.mxu0
      %v2029 = vadd.f32 %v1943, %v2025
      %v2030 = vadd.f32 %v1944, %v2027
      %2032 = vset.pattern.permute.xlu0 0
      %2033 = vperm.xlu0 %2032, %v1268
      %v2034 = vpop.permute.xlu0 %2033
      %v2036 = vadd.f32 %v2029, %v2034
      %v2037 = vadd.f32 %v2030, %v2034
      %v2038 = vxor.u32 %v2036, 2147483648
      %v2039 = vxor.u32 %v2037, 2147483648
      %v2040 = vmul.f32 %v2038, 1.442695
      %v2041 = vpow.pop %v2040
      %v2042 = vmul.f32 %v2039, 1.442695
      %v2043 = vpow.pop %v2042
      %v2044 = vadd.f32 %v2041, 1.0
      %v2045 = vadd.f32 %v2043, 1.0
      %v2046 = vrcp.pop %v2044
      %v2047 = vmul.f32 1.0, %v2046
      %v2048 = vrcp.pop %v2045
      %v2049 = vmul.f32 1.0, %v2048
      %v2050 = vmul.f32 %v2036, %v2047
      %v2051 = vmul.f32 %v2037, %v2049
      %2052 = vst [vmem:[%s305] sm:$0xff] %v2050
      %2053 = vst [vmem:[%s305 + $0x8] sm:$0xff] %v2051
      %p2054 = scmp.lt.s32.totalorder %s19, 1
      %s2055 = scalar_select %p2054, %s19, 1
      %s2056 = smul.addr %s2055, 2
      %s2057 = smul.addr %s2056, 8
      %s2058 = scalar_lea.vmem %s8, %s2057
      // Predicated region
      $region53: #{my_block_forward.1} parent=51 // pred_check
        %p2059 = pneg %p210
      $region54: #{my_block_forward.1} parent=51 // pred_check_branch
        %2061 = sbr.rel (%p2059) target = $region56
      $region55: #{my_block_forward.1} parent=51 // pred_region
        _
      $region56: #{my_block_forward.1} parent=51 // pred_fallthru
        _
    $region52: #{my_block_forward.1} parent=5 // pred_fallthru
      _
    %p2062 = scmp.le.s32.totalorder 2, %s14
    // Predicated region
    $region57: #{my_block_forward.1} parent=5 // pred_check
      %p2063 = pneg %p2062
    $region58: #{my_block_forward.1} parent=5 // pred_check_branch
      %2065 = sbr.rel (%p2063) target = $region60
    $region59: #{my_block_forward.1} parent=5 // pred_region
      %s2066 = ssub.s32 %s14, 2
      // Predicated region
      $region61: #{my_block_forward.1} parent=59 // pred_check
        %p2067 = pneg %p216
      $region62: #{my_block_forward.1} parent=59 // pred_check_branch
        %2069 = sbr.rel (%p2067) target = $region64
      $region63: #{my_block_forward.1} parent=59 // pred_region
        %p2070 = scmp.lt.s32.totalorder %s20, 1
        %s2071 = scalar_select %p2070, %s20, 1
        %s2072 = smul.addr %s2071, 2
        %s2073 = smul.addr %s2072, 8
        %s2074 = scalar_lea.vmem %s8, %s2073
      $region64: #{my_block_forward.1} parent=59 // pred_fallthru
        _
    $region60: #{my_block_forward.1} parent=5 // pred_fallthru
      _
  $region6: #{my_block_forward.1} parent=0 // loop_footer
    %s18 = sadd.s32 1, %s14
  $region7: #{my_block_forward.1} parent=0 // loop_footer_branch
    %13 = sbr.rel target = $region3
  $region8: #{my_block_forward.1} parent=0 // loop_exit
    _

</llo_original>
